<compile_context>
chip_gen: v5e
topology: v5e:2x2
jax: 0.10.0
libtpu: 0.0.40
codegen_flags: <defaults>
</compile_context>

<pallas_src>
import functools
import math

import jax
import jax.numpy as jnp
from jax.experimental import pallas as pl
from jax.experimental.pallas import tpu as pltpu


# --------------------------------------------------------------------------
# Kernel
# --------------------------------------------------------------------------
def _sage_fused_kernel(adj1_ref, x_ref, *rest, num_layers, k, tb):
    """All SAGE layers for one block of tb*K nodes (tb whole K-node batches).

    adj1_ref: (K, K) bf16, adj + I (tied lin_r => self + neighbor terms fused)
    x_ref:    (tb*K, Cin) bf16 node-feature tile
    rest:     num_layers weight refs (C_l, C_{l+1}) bf16, then the output ref.
    """
    w_refs = rest[:num_layers]
    o_ref = rest[num_layers]

    # Broadcast (adj + I) over the tb batches of this block ONCE (hoisted out
    # of the layer loop: JAX does not CSE broadcast_in_dim).
    adj1_b = jnp.broadcast_to(adj1_ref[...], (tb, k, k))          # bf16 (tb,K,K)

    h = x_ref[...]                                                # bf16 (tb*K, Cin)
    for layer in range(num_layers):
        w = w_refs[layer][...]                                    # bf16 (C_l, C_{l+1})
        c = h.shape[-1]
        # Self + neighborhood aggregation:  per batch (adj + I) @ h_b, done as
        # one batched MXU matmul (leading-dim reshape only; f32 accumulation).
        h3 = h.astype(jnp.bfloat16).reshape(tb, k, c)
        h3 = jnp.einsum("bij,bjc->bic", adj1_b, h3,
                        preferred_element_type=jnp.float32)
        # Tied linear lin_r applied once to the fused sum (bf16 in, f32 acc).
        h = jnp.dot(h3.reshape(tb * k, c).astype(jnp.bfloat16), w,
                    preferred_element_type=jnp.float32)
        if layer != num_layers - 1:
            h = jnp.maximum(h, 0.0)                               # ReLU (f32 VPU)

    # Final log_softmax along the feature dim (dim=1), f32 epilogue.
    # NOTE: output stays lane-sparse (cout=8); padding to a 128-lane slab is
    # possible polish if the surrounding model tolerates a padded output.
    m = jnp.max(h, axis=-1, keepdims=True)
    shifted = h - m
    lse = jnp.log(jnp.sum(jnp.exp(shifted), axis=-1, keepdims=True))
    o_ref[...] = (shifted - lse).astype(o_ref.dtype)


# --------------------------------------------------------------------------
# Wrapper helpers
# --------------------------------------------------------------------------
def _pick_rows_per_block(n, k, target_rows):
    """Largest node tile <= target that holds whole K-node batches, stays
    sublane (8) aligned and divides N evenly (no grid remainder)."""
    unit = (k * 8) // math.gcd(k, 8)              # lcm(K, 8)
    if n % unit:
        return n                                  # fall back to a single block
    tile = min(n, max(unit, (target_rows // unit) * unit))
    while n % tile:
        tile -= unit
    return tile


def _const_spec(shape):
    """Grid-invariant operand: constant index_map, single-buffered when the
    running JAX supports pipeline_mode (no pointless second VMEM buffer)."""
    idx = lambda i: (0,) * len(shape)
    try:
        return pl.BlockSpec(shape, idx, pipeline_mode=pl.Buffered(1))
    except (TypeError, AttributeError):           # older JAX: default buffering
        return pl.BlockSpec(shape, idx)


def _vmem_limit_bytes(rows, cin, cout, k, weights):
    """Explicit per-step VMEM budget; never below the 32 MiB default, capped
    well under v7x's 64 MiB physical VMEM."""
    bf16, f32 = 2, 4
    x_io = 2 * rows * cin * bf16                                  # double-buffered x
    o_io = 2 * rows * cout * f32                                  # double-buffered out
    const = (k * k + sum(int(w.size) for w in weights)) * bf16    # single-buffered
    cmax = max([cin, cout] + [int(w.shape[1]) for w in weights])
    live = 6 * rows * cmax * f32                                  # live activations
    est = x_io + o_io + const + live
    return int(min(48 * 2**20, max(2 * est, 32 * 2**20)))


# --------------------------------------------------------------------------
# Forward pass
# --------------------------------------------------------------------------
def sage_forward(x, adj, weights, *, target_rows=256):
    """Full SAGE forward (eval mode) in a single fused Pallas call.

    x:       (N, Cin) node features, N = B*K (B batches of K nodes)
    adj:     (K, K) dense neighborhood matrix, broadcast over batches
    weights: list of (C_l, C_{l+1}) == PyTorch lin_r.weight.T (bias=False)
    """
    n, cin = x.shape
    k = int(adj.shape[0])
    assert n % k == 0, "number of nodes must be a multiple of adj.shape[1]"
    num_layers = len(weights)
    cout = int(weights[-1].shape[1])

    rows = _pick_rows_per_block(n, k, target_rows)   # rows per node tile
    tb = rows // k                                   # whole K-node batches / tile
    grid = (n // rows,)

    # Per-batch aggregation matrix (K, K): adj + I. bf16 for the MXU fast path.
    adj1 = (adj.astype(jnp.float32) + jnp.eye(k, dtype=jnp.float32)
            ).astype(jnp.bfloat16)
    x_bf = x.astype(jnp.bfloat16)                    # halves the x DMA bytes
    w_bf = [w.astype(jnp.bfloat16) for w in weights]

    in_specs = [
        _const_spec((k, k)),                               # adj1 (grid-invariant)
        pl.BlockSpec((rows, cin), lambda i: (i, 0)),       # x node tile
    ] + [_const_spec(tuple(w.shape)) for w in w_bf]        # full weights

    kern = functools.partial(_sage_fused_kernel, num_layers=num_layers, k=k, tb=tb)

    return pl.pallas_call(
        kern,
        out_shape=jax.ShapeDtypeStruct((n, cout), jnp.float32),
        grid=grid,
        in_specs=in_specs,
        out_specs=pl.BlockSpec((rows, cout), lambda i: (i, 0)),
        compiler_params=pltpu.CompilerParams(
            dimension_semantics=("parallel",),
            vmem_limit_bytes=_vmem_limit_bytes(rows, cin, cout, k, weights),
        ),
    )(adj1, x_bf, *w_bf)


# --------------------------------------------------------------------------
# Parameters & references
# --------------------------------------------------------------------------
def init_sage_params(key, in_channels, hidden_channels, out_channels, num_layers):
    """Deterministic weights mimicking nn.Linear's uniform(-1/sqrt(fan_in), ...).
    Stored transposed (fan_in, fan_out): kernel computes x @ W_t == x @ weight.T."""
    if num_layers == 1:
        dims = [(in_channels, out_channels)]
    else:
        dims = [(in_channels, hidden_channels)]
        dims += [(hidden_channels, hidden_channels)] * (num_layers - 2)
        dims += [(hidden_channels, out_channels)]

    weights = []
    for fan_in, fan_out in dims:
        key, sub = jax.random.split(key)
        bound = 1.0 / math.sqrt(float(fan_in))
        weights.append(jax.random.uniform(
            sub, (fan_in, fan_out), dtype=jnp.float32, minval=-bound, maxval=bound))
    return weights


def sage_reference(x, adj, weights):
    """Pure-f32 JAX reference: literal transcription of the PyTorch dense path."""
    k = adj.shape[0]
    num_layers = len(weights)
    h = x
    for i, w in enumerate(weights):
        h1 = h @ w                                         # lin_r(x)
        hr = h.reshape(-1, k, h.shape[1])
        h2 = jnp.einsum("ij,bjc->bic", adj, hr)            # adj @ x (per batch)
        h2 = h2.reshape(-1, h2.shape[2]) @ w               # lin_r(adj @ x)
        h = h1 + h2
        if i != num_layers - 1:
            h = jnp.maximum(h, 0.0)
    return jax.nn.log_softmax(h, axis=1)


def sage_reference_mixed(x, adj, weights):
    """Reference in the kernel's exact evaluation order / precision (fused
    (adj + I) aggregation, bf16 matmul inputs, f32 accumulation)."""
    k = adj.shape[0]
    num_layers = len(weights)
    adj1 = (adj.astype(jnp.float32) + jnp.eye(k, dtype=jnp.float32)
            ).astype(jnp.bfloat16)
    h = x.astype(jnp.bfloat16)
    for i, w in enumerate(weights):
        hr = h.astype(jnp.bfloat16).reshape(-1, k, h.shape[-1])
        agg = jnp.einsum("ij,bjc->bic", adj1, hr, preferred_element_type=jnp.float32)
        h = jnp.dot(agg.reshape(-1, agg.shape[-1]).astype(jnp.bfloat16),
                    w.astype(jnp.bfloat16), preferred_element_type=jnp.float32)
        if i != num_layers - 1:
            h = jnp.maximum(h, 0.0)
    return jax.nn.log_softmax(h, axis=1)


# --------------------------------------------------------------------------
# Test
# --------------------------------------------------------------------------
if __name__ == "__main__":
    key = jax.random.PRNGKey(0)

    # B=128 batches of K=8 nodes -> N=1024, so the grid has 4 pipelined
    # "parallel" steps of 256 rows each (even count for v7x's 2 TensorCores).
    B, K = 128, 8
    in_channels, hidden_channels, out_channels, num_layers = 16, 32, 8, 2
    N = B * K

    k_x, k_a, k_w = jax.random.split(key, 3)
    x = jax.random.normal(k_x, (N, in_channels), dtype=jnp.float32)
    adj = jax.random.uniform(k_a, (K, K), dtype=jnp.float32)
    weights = init_sage_params(k_w, in_channels, hidden_channels,
                               out_channels, num_layers)

    out = jax.block_until_ready(sage_forward(x, adj, weights))
    assert out.shape == (N, out_channels)

    # Tight check vs. a reference in the kernel's own evaluation order /
    # mixed precision (validates tiling, fusion, aggregation, log_softmax).
    ref_mp = sage_reference_mixed(x, adj, weights)
    assert jnp.allclose(out, ref_mp, atol=1e-2, rtol=1e-2), "mismatch vs mixed ref"

    # Loose check vs. the f32 PyTorch-literal reference (bf16 MXU inputs
    # introduce ~1e-2-scale noise; structural bugs would be O(1)).
    ref_f32 = sage_reference(x, adj, weights)
    max_err = float(jnp.max(jnp.abs(out - ref_f32)))
    assert max_err < 1.5e-1, f"kernel diverges from f32 reference: {max_err}"

    print("KERNEL_OK")
</pallas_src>

<mosaic_0001>
module attributes {stable_mosaic.version = 11 : i64} {
  func.func @_sage_fused_kernel(%arg0: i32, %arg1: memref<8x8xbf16, #tpu.memory_space<vmem>>, %arg2: memref<256x16xbf16, #tpu.memory_space<vmem>>, %arg3: memref<16x32xbf16, #tpu.memory_space<vmem>>, %arg4: memref<32x8xbf16, #tpu.memory_space<vmem>>, %arg5: memref<256x8xf32, #tpu.memory_space<vmem>>) attributes {dimension_semantics = [#tpu.dimension_semantics<parallel>], iteration_bounds = array<i64: 4>, scalar_prefetch = 0 : i64, scratch_operands = 0 : i64, tpu.core_type = #tpu.core_type<tc>, window_params = [{pipeline_mode = #tpu.pipeline_mode<synchronous>, transform_indices = @transform_0, window_bounds = array<i64: 8, 8>}, {transform_indices = @transform_1, window_bounds = array<i64: 256, 16>}, {pipeline_mode = #tpu.pipeline_mode<synchronous>, transform_indices = @transform_2, window_bounds = array<i64: 16, 32>}, {pipeline_mode = #tpu.pipeline_mode<synchronous>, transform_indices = @transform_3, window_bounds = array<i64: 32, 8>}, {transform_indices = @transform_4, window_bounds = array<i64: 256, 8>}]} {
    %c0 = arith.constant 0 : index
    %c0_0 = arith.constant 0 : index
    %0 = vector.load %arg1[%c0, %c0_0] : memref<8x8xbf16, #tpu.memory_space<vmem>>, vector<8x8xbf16>
    %1 = vector.shape_cast %0 : vector<8x8xbf16> to vector<1x8x8xbf16>
    %2 = vector.broadcast %1 : vector<1x8x8xbf16> to vector<32x8x8xbf16>
    %c0_1 = arith.constant 0 : index
    %c0_2 = arith.constant 0 : index
    %3 = vector.load %arg2[%c0_1, %c0_2] : memref<256x16xbf16, #tpu.memory_space<vmem>>, vector<256x16xbf16>
    %c0_3 = arith.constant 0 : index
    %c0_4 = arith.constant 0 : index
    %4 = vector.load %arg3[%c0_3, %c0_4] : memref<16x32xbf16, #tpu.memory_space<vmem>>, vector<16x32xbf16>
    %5 = vector.shape_cast %3 : vector<256x16xbf16> to vector<32x8x16xbf16>
    "tpu.trace_start"() <{level = 10 : i32, message = "bij,bjc->bic"}> : () -> ()
    %cst = arith.constant dense<0.000000e+00> : vector<32x8x16xf32>
    %6 = tpu.matmul %2, %5, %cst {dimension_numbers = #tpu.dot_dimension_numbers<[2], [1], [1], [2], [0, 0, 0, 1, 1, 2], [0], [0]>} : vector<32x8x8xbf16>, vector<32x8x16xbf16>, vector<32x8x16xf32> -> vector<32x8x16xf32>
    "tpu.trace_stop"() : () -> ()
    %7 = vector.shape_cast %6 : vector<32x8x16xf32> to vector<256x16xf32>
    %8 = arith.truncf %7 : vector<256x16xf32> to vector<256x16xbf16>
    %cst_5 = arith.constant dense<0.000000e+00> : vector<256x32xf32>
    %9 = tpu.matmul %8, %4, %cst_5 {dimension_numbers = #tpu.dot_dimension_numbers<[1], [0], [0], [1], [0, 0, 1, 1], [], []>} : vector<256x16xbf16>, vector<16x32xbf16>, vector<256x32xf32> -> vector<256x32xf32>
    %cst_6 = arith.constant 0.000000e+00 : f32
    %10 = vector.broadcast %cst_6 : f32 to vector<256x32xf32>
    %11 = arith.maximumf %9, %10 : vector<256x32xf32>
    %c0_7 = arith.constant 0 : index
    %c0_8 = arith.constant 0 : index
    %12 = vector.load %arg4[%c0_7, %c0_8] : memref<32x8xbf16, #tpu.memory_space<vmem>>, vector<32x8xbf16>
    %13 = arith.truncf %11 : vector<256x32xf32> to vector<256x32xbf16>
    %14 = vector.shape_cast %13 : vector<256x32xbf16> to vector<32x8x32xbf16>
    "tpu.trace_start"() <{level = 10 : i32, message = "bij,bjc->bic"}> : () -> ()
    %cst_9 = arith.constant dense<0.000000e+00> : vector<32x8x32xf32>
    %15 = tpu.matmul %2, %14, %cst_9 {dimension_numbers = #tpu.dot_dimension_numbers<[2], [1], [1], [2], [0, 0, 0, 1, 1, 2], [0], [0]>} : vector<32x8x8xbf16>, vector<32x8x32xbf16>, vector<32x8x32xf32> -> vector<32x8x32xf32>
    "tpu.trace_stop"() : () -> ()
    %16 = vector.shape_cast %15 : vector<32x8x32xf32> to vector<256x32xf32>
    %17 = arith.truncf %16 : vector<256x32xf32> to vector<256x32xbf16>
    %cst_10 = arith.constant dense<0.000000e+00> : vector<256x8xf32>
    %18 = tpu.matmul %17, %12, %cst_10 {dimension_numbers = #tpu.dot_dimension_numbers<[1], [0], [0], [1], [0, 0, 1, 1], [], []>} : vector<256x32xbf16>, vector<32x8xbf16>, vector<256x8xf32> -> vector<256x8xf32>
    %cst_11 = arith.constant dense<0xFF800000> : vector<256xf32>
    %19 = vector.multi_reduction <maximumf>, %18, %cst_11 [1] : vector<256x8xf32> to vector<256xf32>
    %20 = vector.shape_cast %19 : vector<256xf32> to vector<256x1xf32>
    %21 = vector.broadcast %20 : vector<256x1xf32> to vector<256x8xf32>
    %22 = arith.subf %18, %21 : vector<256x8xf32>
    %23 = math.exp %22 : vector<256x8xf32>
    %cst_12 = arith.constant dense<0.000000e+00> : vector<256xf32>
    %24 = vector.multi_reduction <add>, %23, %cst_12 [1] : vector<256x8xf32> to vector<256xf32>
    %25 = vector.shape_cast %24 : vector<256xf32> to vector<256x1xf32>
    %26 = math.log %25 : vector<256x1xf32>
    %27 = vector.broadcast %26 : vector<256x1xf32> to vector<256x8xf32>
    %28 = arith.subf %22, %27 : vector<256x8xf32>
    %c0_13 = arith.constant 0 : index
    %c0_14 = arith.constant 0 : index
    %29 = vector.load %arg5[%c0_13, %c0_14] : memref<256x8xf32, #tpu.memory_space<vmem>>, vector<256x8xf32>
    tpu.vector_store %arg5[%c0_13, %c0_14], %28 {strides = array<i32>} : memref<256x8xf32, #tpu.memory_space<vmem>>, vector<256x8xf32>,
    return
  }
  func.func @transform_0(%arg0: i32) -> (i32, i32) {
    %c0_i32 = arith.constant 0 : i32
    %c0_i32_0 = arith.constant 0 : i32
    %c0_i32_1 = arith.constant 0 : i32
    return %c0_i32, %c0_i32_0 : i32, i32
  }
  func.func @transform_1(%arg0: i32) -> (i32, i32) {
    %c0_i32 = arith.constant 0 : i32
    %c0_i32_0 = arith.constant 0 : i32
    return %arg0, %c0_i32 : i32, i32
  }
  func.func @transform_2(%arg0: i32) -> (i32, i32) {
    %c0_i32 = arith.constant 0 : i32
    %c0_i32_0 = arith.constant 0 : i32
    %c0_i32_1 = arith.constant 0 : i32
    return %c0_i32, %c0_i32_0 : i32, i32
  }
  func.func @transform_3(%arg0: i32) -> (i32, i32) {
    %c0_i32 = arith.constant 0 : i32
    %c0_i32_0 = arith.constant 0 : i32
    %c0_i32_1 = arith.constant 0 : i32
    return %c0_i32, %c0_i32_0 : i32, i32
  }
  func.func @transform_4(%arg0: i32) -> (i32, i32) {
    %c0_i32 = arith.constant 0 : i32
    %c0_i32_0 = arith.constant 0 : i32
    return %arg0, %c0_i32 : i32, i32
  }
}

</mosaic_0001>

<llo_original>
// kernel: tpu_custom_call.1
$region0: #{tpu_custom_call.1}
  #allocation0 [shape = 'u32[]', space=smem, size = 0x4, offset = 0x4, fixed_abs, tag = 'smem constant byte address 0x4 - core index']
  #allocation1 [shape = 'u32[72,128]{1,0:T(1,128)}', space=vmem, size = 0x9000, scoped, tag = 'internal scratch']
  %s0 = inlined_call_operand.vmem [shape: bf16[8,8], index: 0, kind: input, shape index: {}]
  %s1 = inlined_call_operand.vmem [shape: bf16[1024,16], index: 1, kind: input, shape index: {}]
  %s2 = inlined_call_operand.vmem [shape: bf16[16,32], index: 2, kind: input, shape index: {}]
  %s3 = inlined_call_operand.vmem [shape: bf16[32,8], index: 3, kind: input, shape index: {}]
  %s4 = inlined_call_operand.vmem [shape: f32[1024,8], index: 4, kind: output, shape index: {}]
  %s5 = sld [smem:[#allocation0]]
  $region49: #{tpu_custom_call.1} parent=0
    _
  %s7 = ssub.s32 1, %s5
  %s8 = scalar_select 0, %s7, %s5
  loop: start=0, step=1, limit=6
  $region2: #{tpu_custom_call.1} parent=0 // loop_pre_header
    _
  $region3: #{tpu_custom_call.1} parent=0 // loop_header
    %s10 = sphi 0, %s14
    %p11 = scmp.ge.s32.totalorder %s10, 6
    %s18 = sphi 0, %s18
    %s20 = sphi 0, %s18
    %s21 = sphi 0, %s20
    %s35 = sphi 0, %s21
    %s41 = sphi 0, %s43
    %s44 = sphi 0, %s41
    %s45 = sphi 0, %s44
    %s61 = sphi 0, %s45
    %s65 = sphi 0, %s65
    %s67 = sphi 0, %s65
    %s68 = sphi 0, %s67
    %s82 = sphi 0, %s68
    %s86 = sphi 0, %s86
    %s88 = sphi 0, %s86
    %s89 = sphi 0, %s88
    %s103 = sphi 0, %s89
    %s109 = sphi 0, %s111
    %s112 = sphi 0, %s109
    %s113 = sphi 0, %s112
    %s129 = sphi 0, %s113
  $region4: #{tpu_custom_call.1} parent=0 // loop_header_branch
    %13 = sbr.rel (%p11) target = $region8
  $region5: #{tpu_custom_call.1} parent=0 // loop_body
    %s15 = ssub.s32 %s10, 1
    %s16 = ssub.s32 %s10, 2
    %s17 = sadd.s32 %s10, 1
    %s19 = sadd.s32 %s18, 1
    %p22 = scmp.eq.s32.totalorder %s10, 3
    %p23 = scmp.ne.s32.totalorder %s18, %s20
    %p24 = scmp.eq.s32.totalorder %s10, 0
    %p25 = por %p23, %p24
    %p26 = scmp.ne.s32.totalorder %s18, %s20
    %p27 = scmp.eq.s32.totalorder %s15, 3
    %p28 = por %p26, %p27
    %p29 = scmp.ne.s32.totalorder %s20, %s21
    %p30 = scmp.eq.s32.totalorder %s15, 0
    %p31 = por %p29, %p30
    %p32 = scmp.ne.s32.totalorder %s20, %s21
    %p33 = scmp.eq.s32.totalorder %s16, 3
    %p34 = por %p32, %p33
    %p36 = scmp.ne.s32.totalorder %s21, %s35
    %p37 = scmp.eq.s32.totalorder %s16, 0
    %p38 = por %p36, %p37
    %s39 = ssub.s32 %s10, %s17
    %p40 = scmp.eq.s32.totalorder %s39, 0
    %s42 = sadd.s32 %s41, 1
    %s43 = scalar_select %p40, %s41, %s42
    %p46 = pneg %p40
    %p47 = scmp.eq.s32.totalorder %s10, 3
    %p48 = por %p46, %p47
    %p49 = scmp.ne.s32.totalorder %s41, %s44
    %p50 = scmp.eq.s32.totalorder %s10, 0
    %p51 = por %p49, %p50
    %p52 = scmp.ne.s32.totalorder %s41, %s44
    %p53 = scmp.eq.s32.totalorder %s15, 3
    %p54 = por %p52, %p53
    %p55 = scmp.ne.s32.totalorder %s44, %s45
    %p56 = scmp.eq.s32.totalorder %s15, 0
    %p57 = por %p55, %p56
    %p58 = scmp.ne.s32.totalorder %s44, %s45
    %p59 = scmp.eq.s32.totalorder %s16, 3
    %p60 = por %p58, %p59
    %p62 = scmp.ne.s32.totalorder %s45, %s61
    %p63 = scmp.eq.s32.totalorder %s16, 0
    %p64 = por %p62, %p63
    %s66 = sadd.s32 %s65, 1
    %p69 = scmp.eq.s32.totalorder %s10, 3
    %p70 = scmp.ne.s32.totalorder %s65, %s67
    %p71 = scmp.eq.s32.totalorder %s10, 0
    %p72 = por %p70, %p71
    %p73 = scmp.ne.s32.totalorder %s65, %s67
    %p74 = scmp.eq.s32.totalorder %s15, 3
    %p75 = por %p73, %p74
    %p76 = scmp.ne.s32.totalorder %s67, %s68
    %p77 = scmp.eq.s32.totalorder %s15, 0
    %p78 = por %p76, %p77
    %p79 = scmp.ne.s32.totalorder %s67, %s68
    %p80 = scmp.eq.s32.totalorder %s16, 3
    %p81 = por %p79, %p80
    %p83 = scmp.ne.s32.totalorder %s68, %s82
    %p84 = scmp.eq.s32.totalorder %s16, 0
    %p85 = por %p83, %p84
    %s87 = sadd.s32 %s86, 1
    %p90 = scmp.eq.s32.totalorder %s10, 3
    %p91 = scmp.ne.s32.totalorder %s86, %s88
    %p92 = scmp.eq.s32.totalorder %s10, 0
    %p93 = por %p91, %p92
    %p94 = scmp.ne.s32.totalorder %s86, %s88
    %p95 = scmp.eq.s32.totalorder %s15, 3
    %p96 = por %p94, %p95
    %p97 = scmp.ne.s32.totalorder %s88, %s89
    %p98 = scmp.eq.s32.totalorder %s15, 0
    %p99 = por %p97, %p98
    %p100 = scmp.ne.s32.totalorder %s88, %s89
    %p101 = scmp.eq.s32.totalorder %s16, 3
    %p102 = por %p100, %p101
    %p104 = scmp.ne.s32.totalorder %s89, %s103
    %p105 = scmp.eq.s32.totalorder %s16, 0
    %p106 = por %p104, %p105
    %s107 = ssub.s32 %s10, %s17
    %p108 = scmp.eq.s32.totalorder %s107, 0
    %s110 = sadd.s32 %s109, 1
    %s111 = scalar_select %p108, %s109, %s110
    %p114 = pneg %p108
    %p115 = scmp.eq.s32.totalorder %s10, 3
    %p116 = por %p114, %p115
    %p117 = scmp.ne.s32.totalorder %s109, %s112
    %p118 = scmp.eq.s32.totalorder %s10, 0
    %p119 = por %p117, %p118
    %p120 = scmp.ne.s32.totalorder %s109, %s112
    %p121 = scmp.eq.s32.totalorder %s15, 3
    %p122 = por %p120, %p121
    %p123 = scmp.ne.s32.totalorder %s112, %s113
    %p124 = scmp.eq.s32.totalorder %s15, 0
    %p125 = por %p123, %p124
    %p126 = scmp.ne.s32.totalorder %s112, %s113
    %p127 = scmp.eq.s32.totalorder %s16, 3
    %p128 = por %p126, %p127
    %p130 = scmp.ne.s32.totalorder %s113, %s129
    %p131 = scmp.eq.s32.totalorder %s16, 0
    %p132 = por %p130, %p131
    %p133 = scmp.le.s32.totalorder 1, %s10
    %p134 = scmp.lt.s32.totalorder %s10, 5
    %p135 = pnand %p133, %p134
    %p136 = pneg %p135
    // Predicated region
    $region9: #{tpu_custom_call.1} parent=5 // pred_check
      _
    $region10: #{tpu_custom_call.1} parent=5 // pred_check_branch
      %138 = sbr.rel (%p135) target = $region12
    $region11: #{tpu_custom_call.1} parent=5 // pred_region
      %s139 = ssub.s32 %s10, 1
      // Predicated region
      $region13: #{tpu_custom_call.1} parent=11 // pred_check
        %p140 = pneg %p31
      $region14: #{tpu_custom_call.1} parent=11 // pred_check_branch
        %142 = sbr.rel (%p140) target = $region16
      $region15: #{tpu_custom_call.1} parent=11 // pred_region
        _
      $region16: #{tpu_custom_call.1} parent=11 // pred_fallthru
        _
      // Predicated region
      $region17: #{tpu_custom_call.1} parent=11 // pred_check
        %p143 = pneg %p78
      $region18: #{tpu_custom_call.1} parent=11 // pred_check_branch
        %145 = sbr.rel (%p143) target = $region20
      $region19: #{tpu_custom_call.1} parent=11 // pred_region
        _
      $region20: #{tpu_custom_call.1} parent=11 // pred_fallthru
        _
      // Predicated region
      $region21: #{tpu_custom_call.1} parent=11 // pred_check
        %p146 = pneg %p99
      $region22: #{tpu_custom_call.1} parent=11 // pred_check_branch
        %148 = sbr.rel (%p146) target = $region24
      $region23: #{tpu_custom_call.1} parent=11 // pred_region
        _
      $region24: #{tpu_custom_call.1} parent=11 // pred_fallthru
        _
    $region12: #{tpu_custom_call.1} parent=5 // pred_fallthru
      _
    %p149 = scmp.lt.s32.totalorder %s10, 4
    // Predicated region
    $region25: #{tpu_custom_call.1} parent=5 // pred_check
      %p150 = pneg %p149
    $region26: #{tpu_custom_call.1} parent=5 // pred_check_branch
      %152 = sbr.rel (%p150) target = $region28
    $region27: #{tpu_custom_call.1} parent=5 // pred_region
      // Predicated region
      $region29: #{tpu_custom_call.1} parent=27 // pred_check
        %p153 = pneg %p51
      $region30: #{tpu_custom_call.1} parent=27 // pred_check_branch
        %155 = sbr.rel (%p153) target = $region32
      $region31: #{tpu_custom_call.1} parent=27 // pred_region
        %s156 = smul.u32 32, %s10
        %p157 = scmp.lt.s32.totalorder %s156, 127
        %s158 = scalar_select %p157, %s156, 127
        %s159 = smul.addr %s158, 4
        %s160 = scalar_lea.vmem %s1, %s159
        %s161 = smul.u32 32, %s10
      $region32: #{tpu_custom_call.1} parent=27 // pred_fallthru
        _
    $region28: #{tpu_custom_call.1} parent=5 // pred_fallthru
      _
    %p162 = scmp.le.s32.totalorder 1, %s10
    %p163 = scmp.lt.s32.totalorder %s10, 5
    %p164 = pnand %p162, %p163
    %p165 = pneg %p164
    // Predicated region
    $region33: #{tpu_custom_call.1} parent=5 // pred_check
      _
    $region34: #{tpu_custom_call.1} parent=5 // pred_check_branch
      %167 = sbr.rel (%p164) target = $region36
    $region35: #{tpu_custom_call.1} parent=5 // pred_region
      %s168 = ssub.s32 %s10, 1
      %p169 = pneg %p31
      %p170 = pneg %p28
      %s171 = smul.u32 32, %s15
      %p172 = scmp.lt.s32.totalorder %s171, 127
      %s173 = scalar_select %p172, %s171, 127
      %s174 = smul.addr %s173, 4
      %s175 = scalar_lea.vmem %s1, %s174
      %p176 = pneg %p57
      %p177 = pneg %p54
      %p178 = pneg %p78
      %p179 = pneg %p75
      %p180 = pneg %p99
      %p181 = pneg %p96
      %p182 = pneg %p125
      %p183 = pneg %p122
      %s184 = smul.u32 32, %s15
      %p185 = scmp.lt.s32.totalorder %s184, 127
      %s186 = scalar_select %p185, %s184, 127
      %s187 = smul.addr %s186, 8
      %s188 = scalar_lea.vmem %s4, %s187
      %s189 = smul.u32 32, %s15
      %p190 = scmp.lt.s32.totalorder %s189, 127
      %s191 = scalar_select %p190, %s189, 127
      %s192 = smul.addr %s191, 4
      %s193 = scalar_lea.vmem %s1, %s192
      %s194 = smul.u32 32, %s15
      %s195 = smul.u32 32, %s15
      %p196 = scmp.lt.s32.totalorder %s195, 127
      %s197 = scalar_select %p196, %s195, 127
      %s198 = smul.addr %s197, 8
      %s199 = scalar_lea.vmem %s4, %s198
      %s200 = smul.u32 32, %s15
      %v202 = vld [vmem:[%s0] sm:$0xf]
      %v203 = vld [vmem:[%s193] sm:$0xf]
      %v204 = vld [vmem:[%s193 + $0x4] sm:$0xf]
      %v205 = vld [vmem:[%s193 + $0x8] sm:$0xf]
      %v206 = vld [vmem:[%s193 + $0xc] sm:$0xf]
      %v207 = vld [vmem:[%s193 + $0x10] sm:$0xf]
      %v208 = vld [vmem:[%s193 + $0x14] sm:$0xf]
      %v209 = vld [vmem:[%s193 + $0x18] sm:$0xf]
      %v210 = vld [vmem:[%s193 + $0x1c] sm:$0xf]
      %v211 = vld [vmem:[%s193 + $0x20] sm:$0xf]
      %v212 = vld [vmem:[%s193 + $0x24] sm:$0xf]
      %v213 = vld [vmem:[%s193 + $0x28] sm:$0xf]
      %v214 = vld [vmem:[%s193 + $0x2c] sm:$0xf]
      %v215 = vld [vmem:[%s193 + $0x30] sm:$0xf]
      %v216 = vld [vmem:[%s193 + $0x34] sm:$0xf]
      %v217 = vld [vmem:[%s193 + $0x38] sm:$0xf]
      %v218 = vld [vmem:[%s193 + $0x3c] sm:$0xf]
      %v219 = vld [vmem:[%s193 + $0x40] sm:$0xf]
      %v220 = vld [vmem:[%s193 + $0x44] sm:$0xf]
      %v221 = vld [vmem:[%s193 + $0x48] sm:$0xf]
      %v222 = vld [vmem:[%s193 + $0x4c] sm:$0xf]
      %v223 = vld [vmem:[%s193 + $0x50] sm:$0xf]
      %v224 = vld [vmem:[%s193 + $0x54] sm:$0xf]
      %v225 = vld [vmem:[%s193 + $0x58] sm:$0xf]
      %v226 = vld [vmem:[%s193 + $0x5c] sm:$0xf]
      %v227 = vld [vmem:[%s193 + $0x60] sm:$0xf]
      %v228 = vld [vmem:[%s193 + $0x64] sm:$0xf]
      %v229 = vld [vmem:[%s193 + $0x68] sm:$0xf]
      %v230 = vld [vmem:[%s193 + $0x6c] sm:$0xf]
      %v231 = vld [vmem:[%s193 + $0x70] sm:$0xf]
      %v232 = vld [vmem:[%s193 + $0x74] sm:$0xf]
      %v233 = vld [vmem:[%s193 + $0x78] sm:$0xf]
      %v234 = vld [vmem:[%s193 + $0x7c] sm:$0xf]
      %v235 = vld [vmem:[%s2] sm:$0xf]
      %v236 = vld [vmem:[%s2 + $0x4] sm:$0xf]
      %vm237 = vcmask 64512
      %v239 = vsel %vm237, %v202, 0
      %vm241 = vcmask 1043456
      %v243 = vsel %vm241, %v203, 0
      %245 = vmatpush.bf16.msra.mxu0 0
      %246 = vmatpush.bf16.msra.mxu0 0
      %247 = vmatpush.bf16.msra.mxu0 0
      %248 = vmatpush.bf16.msra.mxu0 0
      %249 = vmatpush.bf16.msra.mxu0 0
      %250 = vmatpush.bf16.msra.mxu0 0
      %251 = vmatpush.bf16.msra.mxu0 0
      %252 = vmatpush.bf16.msra.mxu0 %v243
      %253 = vmatmul.bf16.gmra.mxu0 %v239
      %v254 = vpop.f32.mrf.mxu0
      %v255 = vadd.f32 0.0, %v254
      %v256 = vpop.f32.mrf.mxu0
      %257 = vdwg.mxu0
      %v259 = vsel %vm241, %v204, 0
      %261 = vmatpush.bf16.msra.mxu0 0
      %262 = vmatpush.bf16.msra.mxu0 0
      %263 = vmatpush.bf16.msra.mxu0 0
      %264 = vmatpush.bf16.msra.mxu0 0
      %265 = vmatpush.bf16.msra.mxu0 0
      %266 = vmatpush.bf16.msra.mxu0 0
      %267 = vmatpush.bf16.msra.mxu0 0
      %268 = vmatpush.bf16.msra.mxu0 %v259
      %269 = vmatmul.bf16.gmra.mxu0 %v239
      %v270 = vpop.f32.mrf.mxu0
      %v271 = vadd.f32 0.0, %v270
      %v272 = vpop.f32.mrf.mxu0
      %273 = vdwg.mxu0
      %v275 = vsel %vm241, %v205, 0
      %277 = vmatpush.bf16.msra.mxu0 0
      %278 = vmatpush.bf16.msra.mxu0 0
      %279 = vmatpush.bf16.msra.mxu0 0
      %280 = vmatpush.bf16.msra.mxu0 0
      %281 = vmatpush.bf16.msra.mxu0 0
      %282 = vmatpush.bf16.msra.mxu0 0
      %283 = vmatpush.bf16.msra.mxu0 0
      %284 = vmatpush.bf16.msra.mxu0 %v275
      %285 = vmatmul.bf16.gmra.mxu0 %v239
      %v286 = vpop.f32.mrf.mxu0
      %v287 = vadd.f32 0.0, %v286
      %v288 = vpop.f32.mrf.mxu0
      %289 = vdwg.mxu0
      %v291 = vsel %vm241, %v206, 0
      %293 = vmatpush.bf16.msra.mxu0 0
      %294 = vmatpush.bf16.msra.mxu0 0
      %295 = vmatpush.bf16.msra.mxu0 0
      %296 = vmatpush.bf16.msra.mxu0 0
      %297 = vmatpush.bf16.msra.mxu0 0
      %298 = vmatpush.bf16.msra.mxu0 0
      %299 = vmatpush.bf16.msra.mxu0 0
      %300 = vmatpush.bf16.msra.mxu0 %v291
      %301 = vmatmul.bf16.gmra.mxu0 %v239
      %v302 = vpop.f32.mrf.mxu0
      %v303 = vadd.f32 0.0, %v302
      %v304 = vpop.f32.mrf.mxu0
      %305 = vdwg.mxu0
      %v307 = vsel %vm241, %v207, 0
      %309 = vmatpush.bf16.msra.mxu0 0
      %310 = vmatpush.bf16.msra.mxu0 0
      %311 = vmatpush.bf16.msra.mxu0 0
      %312 = vmatpush.bf16.msra.mxu0 0
      %313 = vmatpush.bf16.msra.mxu0 0
      %314 = vmatpush.bf16.msra.mxu0 0
      %315 = vmatpush.bf16.msra.mxu0 0
      %316 = vmatpush.bf16.msra.mxu0 %v307
      %317 = vmatmul.bf16.gmra.mxu0 %v239
      %v318 = vpop.f32.mrf.mxu0
      %v319 = vadd.f32 0.0, %v318
      %v320 = vpop.f32.mrf.mxu0
      %321 = vdwg.mxu0
      %v323 = vsel %vm241, %v208, 0
      %325 = vmatpush.bf16.msra.mxu0 0
      %326 = vmatpush.bf16.msra.mxu0 0
      %327 = vmatpush.bf16.msra.mxu0 0
      %328 = vmatpush.bf16.msra.mxu0 0
      %329 = vmatpush.bf16.msra.mxu0 0
      %330 = vmatpush.bf16.msra.mxu0 0
      %331 = vmatpush.bf16.msra.mxu0 0
      %332 = vmatpush.bf16.msra.mxu0 %v323
      %333 = vmatmul.bf16.gmra.mxu0 %v239
      %v334 = vpop.f32.mrf.mxu0
      %v335 = vadd.f32 0.0, %v334
      %v336 = vpop.f32.mrf.mxu0
      %337 = vdwg.mxu0
      %v339 = vsel %vm241, %v209, 0
      %341 = vmatpush.bf16.msra.mxu0 0
      %342 = vmatpush.bf16.msra.mxu0 0
      %343 = vmatpush.bf16.msra.mxu0 0
      %344 = vmatpush.bf16.msra.mxu0 0
      %345 = vmatpush.bf16.msra.mxu0 0
      %346 = vmatpush.bf16.msra.mxu0 0
      %347 = vmatpush.bf16.msra.mxu0 0
      %348 = vmatpush.bf16.msra.mxu0 %v339
      %349 = vmatmul.bf16.gmra.mxu0 %v239
      %v350 = vpop.f32.mrf.mxu0
      %v351 = vadd.f32 0.0, %v350
      %v352 = vpop.f32.mrf.mxu0
      %353 = vdwg.mxu0
      %v355 = vsel %vm241, %v210, 0
      %357 = vmatpush.bf16.msra.mxu0 0
      %358 = vmatpush.bf16.msra.mxu0 0
      %359 = vmatpush.bf16.msra.mxu0 0
      %360 = vmatpush.bf16.msra.mxu0 0
      %361 = vmatpush.bf16.msra.mxu0 0
      %362 = vmatpush.bf16.msra.mxu0 0
      %363 = vmatpush.bf16.msra.mxu0 0
      %364 = vmatpush.bf16.msra.mxu0 %v355
      %365 = vmatmul.bf16.gmra.mxu0 %v239
      %v366 = vpop.f32.mrf.mxu0
      %v367 = vadd.f32 0.0, %v366
      %v368 = vpop.f32.mrf.mxu0
      %369 = vdwg.mxu0
      %v371 = vsel %vm241, %v211, 0
      %373 = vmatpush.bf16.msra.mxu0 0
      %374 = vmatpush.bf16.msra.mxu0 0
      %375 = vmatpush.bf16.msra.mxu0 0
      %376 = vmatpush.bf16.msra.mxu0 0
      %377 = vmatpush.bf16.msra.mxu0 0
      %378 = vmatpush.bf16.msra.mxu0 0
      %379 = vmatpush.bf16.msra.mxu0 0
      %380 = vmatpush.bf16.msra.mxu0 %v371
      %381 = vmatmul.bf16.gmra.mxu0 %v239
      %v382 = vpop.f32.mrf.mxu0
      %v383 = vadd.f32 0.0, %v382
      %v384 = vpop.f32.mrf.mxu0
      %385 = vdwg.mxu0
      %v387 = vsel %vm241, %v212, 0
      %389 = vmatpush.bf16.msra.mxu0 0
      %390 = vmatpush.bf16.msra.mxu0 0
      %391 = vmatpush.bf16.msra.mxu0 0
      %392 = vmatpush.bf16.msra.mxu0 0
      %393 = vmatpush.bf16.msra.mxu0 0
      %394 = vmatpush.bf16.msra.mxu0 0
      %395 = vmatpush.bf16.msra.mxu0 0
      %396 = vmatpush.bf16.msra.mxu0 %v387
      %397 = vmatmul.bf16.gmra.mxu0 %v239
      %v398 = vpop.f32.mrf.mxu0
      %v399 = vadd.f32 0.0, %v398
      %v400 = vpop.f32.mrf.mxu0
      %401 = vdwg.mxu0
      %v403 = vsel %vm241, %v213, 0
      %405 = vmatpush.bf16.msra.mxu0 0
      %406 = vmatpush.bf16.msra.mxu0 0
      %407 = vmatpush.bf16.msra.mxu0 0
      %408 = vmatpush.bf16.msra.mxu0 0
      %409 = vmatpush.bf16.msra.mxu0 0
      %410 = vmatpush.bf16.msra.mxu0 0
      %411 = vmatpush.bf16.msra.mxu0 0
      %412 = vmatpush.bf16.msra.mxu0 %v403
      %413 = vmatmul.bf16.gmra.mxu0 %v239
      %v414 = vpop.f32.mrf.mxu0
      %v415 = vadd.f32 0.0, %v414
      %v416 = vpop.f32.mrf.mxu0
      %417 = vdwg.mxu0
      %v419 = vsel %vm241, %v214, 0
      %421 = vmatpush.bf16.msra.mxu0 0
      %422 = vmatpush.bf16.msra.mxu0 0
      %423 = vmatpush.bf16.msra.mxu0 0
      %424 = vmatpush.bf16.msra.mxu0 0
      %425 = vmatpush.bf16.msra.mxu0 0
      %426 = vmatpush.bf16.msra.mxu0 0
      %427 = vmatpush.bf16.msra.mxu0 0
      %428 = vmatpush.bf16.msra.mxu0 %v419
      %429 = vmatmul.bf16.gmra.mxu0 %v239
      %v430 = vpop.f32.mrf.mxu0
      %v431 = vadd.f32 0.0, %v430
      %v432 = vpop.f32.mrf.mxu0
      %433 = vdwg.mxu0
      %v435 = vsel %vm241, %v215, 0
      %437 = vmatpush.bf16.msra.mxu0 0
      %438 = vmatpush.bf16.msra.mxu0 0
      %439 = vmatpush.bf16.msra.mxu0 0
      %440 = vmatpush.bf16.msra.mxu0 0
      %441 = vmatpush.bf16.msra.mxu0 0
      %442 = vmatpush.bf16.msra.mxu0 0
      %443 = vmatpush.bf16.msra.mxu0 0
      %444 = vmatpush.bf16.msra.mxu0 %v435
      %445 = vmatmul.bf16.gmra.mxu0 %v239
      %v446 = vpop.f32.mrf.mxu0
      %v447 = vadd.f32 0.0, %v446
      %v448 = vpop.f32.mrf.mxu0
      %449 = vdwg.mxu0
      %v451 = vsel %vm241, %v216, 0
      %453 = vmatpush.bf16.msra.mxu0 0
      %454 = vmatpush.bf16.msra.mxu0 0
      %455 = vmatpush.bf16.msra.mxu0 0
      %456 = vmatpush.bf16.msra.mxu0 0
      %457 = vmatpush.bf16.msra.mxu0 0
      %458 = vmatpush.bf16.msra.mxu0 0
      %459 = vmatpush.bf16.msra.mxu0 0
      %460 = vmatpush.bf16.msra.mxu0 %v451
      %461 = vmatmul.bf16.gmra.mxu0 %v239
      %v462 = vpop.f32.mrf.mxu0
      %v463 = vadd.f32 0.0, %v462
      %v464 = vpop.f32.mrf.mxu0
      %465 = vdwg.mxu0
      %v467 = vsel %vm241, %v217, 0
      %469 = vmatpush.bf16.msra.mxu0 0
      %470 = vmatpush.bf16.msra.mxu0 0
      %471 = vmatpush.bf16.msra.mxu0 0
      %472 = vmatpush.bf16.msra.mxu0 0
      %473 = vmatpush.bf16.msra.mxu0 0
      %474 = vmatpush.bf16.msra.mxu0 0
      %475 = vmatpush.bf16.msra.mxu0 0
      %476 = vmatpush.bf16.msra.mxu0 %v467
      %477 = vmatmul.bf16.gmra.mxu0 %v239
      %v478 = vpop.f32.mrf.mxu0
      %v479 = vadd.f32 0.0, %v478
      %v480 = vpop.f32.mrf.mxu0
      %481 = vdwg.mxu0
      %v483 = vsel %vm241, %v218, 0
      %485 = vmatpush.bf16.msra.mxu0 0
      %486 = vmatpush.bf16.msra.mxu0 0
      %487 = vmatpush.bf16.msra.mxu0 0
      %488 = vmatpush.bf16.msra.mxu0 0
      %489 = vmatpush.bf16.msra.mxu0 0
      %490 = vmatpush.bf16.msra.mxu0 0
      %491 = vmatpush.bf16.msra.mxu0 0
      %492 = vmatpush.bf16.msra.mxu0 %v483
      %493 = vmatmul.bf16.gmra.mxu0 %v239
      %v494 = vpop.f32.mrf.mxu0
      %v495 = vadd.f32 0.0, %v494
      %v496 = vpop.f32.mrf.mxu0
      %497 = vdwg.mxu0
      %v499 = vsel %vm241, %v219, 0
      %501 = vmatpush.bf16.msra.mxu0 0
      %502 = vmatpush.bf16.msra.mxu0 0
      %503 = vmatpush.bf16.msra.mxu0 0
      %504 = vmatpush.bf16.msra.mxu0 0
      %505 = vmatpush.bf16.msra.mxu0 0
      %506 = vmatpush.bf16.msra.mxu0 0
      %507 = vmatpush.bf16.msra.mxu0 0
      %508 = vmatpush.bf16.msra.mxu0 %v499
      %509 = vmatmul.bf16.gmra.mxu0 %v239
      %v510 = vpop.f32.mrf.mxu0
      %v511 = vadd.f32 0.0, %v510
      %v512 = vpop.f32.mrf.mxu0
      %513 = vdwg.mxu0
      %v515 = vsel %vm241, %v220, 0
      %517 = vmatpush.bf16.msra.mxu0 0
      %518 = vmatpush.bf16.msra.mxu0 0
      %519 = vmatpush.bf16.msra.mxu0 0
      %520 = vmatpush.bf16.msra.mxu0 0
      %521 = vmatpush.bf16.msra.mxu0 0
      %522 = vmatpush.bf16.msra.mxu0 0
      %523 = vmatpush.bf16.msra.mxu0 0
      %524 = vmatpush.bf16.msra.mxu0 %v515
      %525 = vmatmul.bf16.gmra.mxu0 %v239
      %v526 = vpop.f32.mrf.mxu0
      %v527 = vadd.f32 0.0, %v526
      %v528 = vpop.f32.mrf.mxu0
      %529 = vdwg.mxu0
      %v531 = vsel %vm241, %v221, 0
      %533 = vmatpush.bf16.msra.mxu0 0
      %534 = vmatpush.bf16.msra.mxu0 0
      %535 = vmatpush.bf16.msra.mxu0 0
      %536 = vmatpush.bf16.msra.mxu0 0
      %537 = vmatpush.bf16.msra.mxu0 0
      %538 = vmatpush.bf16.msra.mxu0 0
      %539 = vmatpush.bf16.msra.mxu0 0
      %540 = vmatpush.bf16.msra.mxu0 %v531
      %541 = vmatmul.bf16.gmra.mxu0 %v239
      %v542 = vpop.f32.mrf.mxu0
      %v543 = vadd.f32 0.0, %v542
      %v544 = vpop.f32.mrf.mxu0
      %545 = vdwg.mxu0
      %v547 = vsel %vm241, %v222, 0
      %549 = vmatpush.bf16.msra.mxu0 0
      %550 = vmatpush.bf16.msra.mxu0 0
      %551 = vmatpush.bf16.msra.mxu0 0
      %552 = vmatpush.bf16.msra.mxu0 0
      %553 = vmatpush.bf16.msra.mxu0 0
      %554 = vmatpush.bf16.msra.mxu0 0
      %555 = vmatpush.bf16.msra.mxu0 0
      %556 = vmatpush.bf16.msra.mxu0 %v547
      %557 = vmatmul.bf16.gmra.mxu0 %v239
      %v558 = vpop.f32.mrf.mxu0
      %v559 = vadd.f32 0.0, %v558
      %v560 = vpop.f32.mrf.mxu0
      %561 = vdwg.mxu0
      %v563 = vsel %vm241, %v223, 0
      %565 = vmatpush.bf16.msra.mxu0 0
      %566 = vmatpush.bf16.msra.mxu0 0
      %567 = vmatpush.bf16.msra.mxu0 0
      %568 = vmatpush.bf16.msra.mxu0 0
      %569 = vmatpush.bf16.msra.mxu0 0
      %570 = vmatpush.bf16.msra.mxu0 0
      %571 = vmatpush.bf16.msra.mxu0 0
      %572 = vmatpush.bf16.msra.mxu0 %v563
      %573 = vmatmul.bf16.gmra.mxu0 %v239
      %v574 = vpop.f32.mrf.mxu0
      %v575 = vadd.f32 0.0, %v574
      %v576 = vpop.f32.mrf.mxu0
      %577 = vdwg.mxu0
      %v579 = vsel %vm241, %v224, 0
      %581 = vmatpush.bf16.msra.mxu0 0
      %582 = vmatpush.bf16.msra.mxu0 0
      %583 = vmatpush.bf16.msra.mxu0 0
      %584 = vmatpush.bf16.msra.mxu0 0
      %585 = vmatpush.bf16.msra.mxu0 0
      %586 = vmatpush.bf16.msra.mxu0 0
      %587 = vmatpush.bf16.msra.mxu0 0
      %588 = vmatpush.bf16.msra.mxu0 %v579
      %589 = vmatmul.bf16.gmra.mxu0 %v239
      %v590 = vpop.f32.mrf.mxu0
      %v591 = vadd.f32 0.0, %v590
      %v592 = vpop.f32.mrf.mxu0
      %593 = vdwg.mxu0
      %v595 = vsel %vm241, %v225, 0
      %597 = vmatpush.bf16.msra.mxu0 0
      %598 = vmatpush.bf16.msra.mxu0 0
      %599 = vmatpush.bf16.msra.mxu0 0
      %600 = vmatpush.bf16.msra.mxu0 0
      %601 = vmatpush.bf16.msra.mxu0 0
      %602 = vmatpush.bf16.msra.mxu0 0
      %603 = vmatpush.bf16.msra.mxu0 0
      %604 = vmatpush.bf16.msra.mxu0 %v595
      %605 = vmatmul.bf16.gmra.mxu0 %v239
      %v606 = vpop.f32.mrf.mxu0
      %v607 = vadd.f32 0.0, %v606
      %v608 = vpop.f32.mrf.mxu0
      %609 = vdwg.mxu0
      %v611 = vsel %vm241, %v226, 0
      %613 = vmatpush.bf16.msra.mxu0 0
      %614 = vmatpush.bf16.msra.mxu0 0
      %615 = vmatpush.bf16.msra.mxu0 0
      %616 = vmatpush.bf16.msra.mxu0 0
      %617 = vmatpush.bf16.msra.mxu0 0
      %618 = vmatpush.bf16.msra.mxu0 0
      %619 = vmatpush.bf16.msra.mxu0 0
      %620 = vmatpush.bf16.msra.mxu0 %v611
      %621 = vmatmul.bf16.gmra.mxu0 %v239
      %v622 = vpop.f32.mrf.mxu0
      %v623 = vadd.f32 0.0, %v622
      %v624 = vpop.f32.mrf.mxu0
      %625 = vdwg.mxu0
      %v627 = vsel %vm241, %v227, 0
      %629 = vmatpush.bf16.msra.mxu0 0
      %630 = vmatpush.bf16.msra.mxu0 0
      %631 = vmatpush.bf16.msra.mxu0 0
      %632 = vmatpush.bf16.msra.mxu0 0
      %633 = vmatpush.bf16.msra.mxu0 0
      %634 = vmatpush.bf16.msra.mxu0 0
      %635 = vmatpush.bf16.msra.mxu0 0
      %636 = vmatpush.bf16.msra.mxu0 %v627
      %637 = vmatmul.bf16.gmra.mxu0 %v239
      %v638 = vpop.f32.mrf.mxu0
      %v639 = vadd.f32 0.0, %v638
      %v640 = vpop.f32.mrf.mxu0
      %641 = vdwg.mxu0
      %v643 = vsel %vm241, %v228, 0
      %645 = vmatpush.bf16.msra.mxu0 0
      %646 = vmatpush.bf16.msra.mxu0 0
      %647 = vmatpush.bf16.msra.mxu0 0
      %648 = vmatpush.bf16.msra.mxu0 0
      %649 = vmatpush.bf16.msra.mxu0 0
      %650 = vmatpush.bf16.msra.mxu0 0
      %651 = vmatpush.bf16.msra.mxu0 0
      %652 = vmatpush.bf16.msra.mxu0 %v643
      %653 = vmatmul.bf16.gmra.mxu0 %v239
      %v654 = vpop.f32.mrf.mxu0
      %v655 = vadd.f32 0.0, %v654
      %v656 = vpop.f32.mrf.mxu0
      %657 = vdwg.mxu0
      %v659 = vsel %vm241, %v229, 0
      %661 = vmatpush.bf16.msra.mxu0 0
      %662 = vmatpush.bf16.msra.mxu0 0
      %663 = vmatpush.bf16.msra.mxu0 0
      %664 = vmatpush.bf16.msra.mxu0 0
      %665 = vmatpush.bf16.msra.mxu0 0
      %666 = vmatpush.bf16.msra.mxu0 0
      %667 = vmatpush.bf16.msra.mxu0 0
      %668 = vmatpush.bf16.msra.mxu0 %v659
      %669 = vmatmul.bf16.gmra.mxu0 %v239
      %v670 = vpop.f32.mrf.mxu0
      %v671 = vadd.f32 0.0, %v670
      %v672 = vpop.f32.mrf.mxu0
      %673 = vdwg.mxu0
      %v675 = vsel %vm241, %v230, 0
      %677 = vmatpush.bf16.msra.mxu0 0
      %678 = vmatpush.bf16.msra.mxu0 0
      %679 = vmatpush.bf16.msra.mxu0 0
      %680 = vmatpush.bf16.msra.mxu0 0
      %681 = vmatpush.bf16.msra.mxu0 0
      %682 = vmatpush.bf16.msra.mxu0 0
      %683 = vmatpush.bf16.msra.mxu0 0
      %684 = vmatpush.bf16.msra.mxu0 %v675
      %685 = vmatmul.bf16.gmra.mxu0 %v239
      %v686 = vpop.f32.mrf.mxu0
      %v687 = vadd.f32 0.0, %v686
      %v688 = vpop.f32.mrf.mxu0
      %689 = vdwg.mxu0
      %v691 = vsel %vm241, %v231, 0
      %693 = vmatpush.bf16.msra.mxu0 0
      %694 = vmatpush.bf16.msra.mxu0 0
      %695 = vmatpush.bf16.msra.mxu0 0
      %696 = vmatpush.bf16.msra.mxu0 0
      %697 = vmatpush.bf16.msra.mxu0 0
      %698 = vmatpush.bf16.msra.mxu0 0
      %699 = vmatpush.bf16.msra.mxu0 0
      %700 = vmatpush.bf16.msra.mxu0 %v691
      %701 = vmatmul.bf16.gmra.mxu0 %v239
      %v702 = vpop.f32.mrf.mxu0
      %v703 = vadd.f32 0.0, %v702
      %v704 = vpop.f32.mrf.mxu0
      %705 = vdwg.mxu0
      %v707 = vsel %vm241, %v232, 0
      %709 = vmatpush.bf16.msra.mxu0 0
      %710 = vmatpush.bf16.msra.mxu0 0
      %711 = vmatpush.bf16.msra.mxu0 0
      %712 = vmatpush.bf16.msra.mxu0 0
      %713 = vmatpush.bf16.msra.mxu0 0
      %714 = vmatpush.bf16.msra.mxu0 0
      %715 = vmatpush.bf16.msra.mxu0 0
      %716 = vmatpush.bf16.msra.mxu0 %v707
      %717 = vmatmul.bf16.gmra.mxu0 %v239
      %v718 = vpop.f32.mrf.mxu0
      %v719 = vadd.f32 0.0, %v718
      %v720 = vpop.f32.mrf.mxu0
      %721 = vdwg.mxu0
      %v723 = vsel %vm241, %v233, 0
      %725 = vmatpush.bf16.msra.mxu0 0
      %726 = vmatpush.bf16.msra.mxu0 0
      %727 = vmatpush.bf16.msra.mxu0 0
      %728 = vmatpush.bf16.msra.mxu0 0
      %729 = vmatpush.bf16.msra.mxu0 0
      %730 = vmatpush.bf16.msra.mxu0 0
      %731 = vmatpush.bf16.msra.mxu0 0
      %732 = vmatpush.bf16.msra.mxu0 %v723
      %733 = vmatmul.bf16.gmra.mxu0 %v239
      %v734 = vpop.f32.mrf.mxu0
      %v735 = vadd.f32 0.0, %v734
      %v736 = vpop.f32.mrf.mxu0
      %737 = vdwg.mxu0
      %v739 = vsel %vm241, %v234, 0
      %741 = vmatpush.bf16.msra.mxu0 0
      %742 = vmatpush.bf16.msra.mxu0 0
      %743 = vmatpush.bf16.msra.mxu0 0
      %744 = vmatpush.bf16.msra.mxu0 0
      %745 = vmatpush.bf16.msra.mxu0 0
      %746 = vmatpush.bf16.msra.mxu0 0
      %747 = vmatpush.bf16.msra.mxu0 0
      %748 = vmatpush.bf16.msra.mxu0 %v739
      %749 = vmatmul.bf16.gmra.mxu0 %v239
      %v750 = vpop.f32.mrf.mxu0
      %v751 = vadd.f32 0.0, %v750
      %v752 = vpop.f32.mrf.mxu0
      %753 = vdwg.mxu0
      %v754 = vpack.c.bf16 %v271, %v255
      %v755 = vpack.c.bf16 %v303, %v287
      %v756 = vpack.c.bf16 %v335, %v319
      %v757 = vpack.c.bf16 %v367, %v351
      %v758 = vpack.c.bf16 %v399, %v383
      %v759 = vpack.c.bf16 %v431, %v415
      %v760 = vpack.c.bf16 %v463, %v447
      %v761 = vpack.c.bf16 %v495, %v479
      %v762 = vpack.c.bf16 %v527, %v511
      %v763 = vpack.c.bf16 %v559, %v543
      %v764 = vpack.c.bf16 %v591, %v575
      %v765 = vpack.c.bf16 %v623, %v607
      %v766 = vpack.c.bf16 %v655, %v639
      %v767 = vpack.c.bf16 %v687, %v671
      %v768 = vpack.c.bf16 %v719, %v703
      %v769 = vpack.c.bf16 %v751, %v735
      %v772 = vunpack.c.l.b16 %v235
      %v773 = vunpack.c.l.b16 %v236
      %v774 = vpack.c.b16 %v773, %v772
      %vm776 = vcmask 130048
      %v778 = vsel %vm776, %v754, 0
      %v781 = vsel %vm776, %v755, 0
      %v784 = vsel %vm776, %v756, 0
      %v787 = vsel %vm776, %v757, 0
      %v790 = vsel %vm776, %v758, 0
      %v793 = vsel %vm776, %v759, 0
      %v796 = vsel %vm776, %v760, 0
      %v799 = vsel %vm776, %v761, 0
      %v802 = vsel %vm776, %v762, 0
      %v805 = vsel %vm776, %v763, 0
      %v808 = vsel %vm776, %v764, 0
      %v811 = vsel %vm776, %v765, 0
      %v814 = vsel %vm776, %v766, 0
      %v817 = vsel %vm776, %v767, 0
      %v820 = vsel %vm776, %v768, 0
      %v823 = vsel %vm776, %v769, 0
      %825 = vmatpush.bf16.msra.mxu0 0
      %826 = vmatpush.bf16.msra.mxu0 0
      %827 = vmatpush.bf16.msra.mxu0 0
      %828 = vmatpush.bf16.msra.mxu0 0
      %829 = vmatpush.bf16.msra.mxu0 0
      %830 = vmatpush.bf16.msra.mxu0 0
      %831 = vmatpush.bf16.msra.mxu0 0
      %832 = vmatpush.bf16.msra.mxu0 %v774
      %833 = vmatmul.bf16.gmra.mxu0 %v778
      %v834 = vpop.f32.mrf.mxu0
      %v835 = vadd.f32 0.0, %v834
      %v836 = vpop.f32.mrf.mxu0
      %v837 = vadd.f32 0.0, %v836
      %838 = vmatmul.bf16.gmra.mxu0 %v781
      %v839 = vpop.f32.mrf.mxu0
      %v840 = vadd.f32 0.0, %v839
      %v841 = vpop.f32.mrf.mxu0
      %v842 = vadd.f32 0.0, %v841
      %843 = vmatmul.bf16.gmra.mxu0 %v784
      %v844 = vpop.f32.mrf.mxu0
      %v845 = vadd.f32 0.0, %v844
      %v846 = vpop.f32.mrf.mxu0
      %v847 = vadd.f32 0.0, %v846
      %848 = vmatmul.bf16.gmra.mxu0 %v787
      %v849 = vpop.f32.mrf.mxu0
      %v850 = vadd.f32 0.0, %v849
      %v851 = vpop.f32.mrf.mxu0
      %v852 = vadd.f32 0.0, %v851
      %853 = vmatmul.bf16.gmra.mxu0 %v790
      %v854 = vpop.f32.mrf.mxu0
      %v855 = vadd.f32 0.0, %v854
      %v856 = vpop.f32.mrf.mxu0
      %v857 = vadd.f32 0.0, %v856
      %858 = vmatmul.bf16.gmra.mxu0 %v793
      %v859 = vpop.f32.mrf.mxu0
      %v860 = vadd.f32 0.0, %v859
      %v861 = vpop.f32.mrf.mxu0
      %v862 = vadd.f32 0.0, %v861
      %863 = vmatmul.bf16.gmra.mxu0 %v796
      %v864 = vpop.f32.mrf.mxu0
      %v865 = vadd.f32 0.0, %v864
      %v866 = vpop.f32.mrf.mxu0
      %v867 = vadd.f32 0.0, %v866
      %868 = vmatmul.bf16.gmra.mxu0 %v799
      %v869 = vpop.f32.mrf.mxu0
      %v870 = vadd.f32 0.0, %v869
      %v871 = vpop.f32.mrf.mxu0
      %v872 = vadd.f32 0.0, %v871
      %873 = vmatmul.bf16.gmra.mxu0 %v802
      %v874 = vpop.f32.mrf.mxu0
      %v875 = vadd.f32 0.0, %v874
      %v876 = vpop.f32.mrf.mxu0
      %v877 = vadd.f32 0.0, %v876
      %878 = vmatmul.bf16.gmra.mxu0 %v805
      %v879 = vpop.f32.mrf.mxu0
      %v880 = vadd.f32 0.0, %v879
      %v881 = vpop.f32.mrf.mxu0
      %v882 = vadd.f32 0.0, %v881
      %883 = vmatmul.bf16.gmra.mxu0 %v808
      %v884 = vpop.f32.mrf.mxu0
      %v885 = vadd.f32 0.0, %v884
      %v886 = vpop.f32.mrf.mxu0
      %v887 = vadd.f32 0.0, %v886
      %888 = vmatmul.bf16.gmra.mxu0 %v811
      %v889 = vpop.f32.mrf.mxu0
      %v890 = vadd.f32 0.0, %v889
      %v891 = vpop.f32.mrf.mxu0
      %v892 = vadd.f32 0.0, %v891
      %893 = vmatmul.bf16.gmra.mxu0 %v814
      %v894 = vpop.f32.mrf.mxu0
      %v895 = vadd.f32 0.0, %v894
      %v896 = vpop.f32.mrf.mxu0
      %v897 = vadd.f32 0.0, %v896
      %898 = vmatmul.bf16.gmra.mxu0 %v817
      %v899 = vpop.f32.mrf.mxu0
      %v900 = vadd.f32 0.0, %v899
      %v901 = vpop.f32.mrf.mxu0
      %v902 = vadd.f32 0.0, %v901
      %903 = vmatmul.bf16.gmra.mxu0 %v820
      %v904 = vpop.f32.mrf.mxu0
      %v905 = vadd.f32 0.0, %v904
      %v906 = vpop.f32.mrf.mxu0
      %v907 = vadd.f32 0.0, %v906
      %908 = vmatmul.bf16.gmra.mxu0 %v823
      %v909 = vpop.f32.mrf.mxu0
      %v910 = vadd.f32 0.0, %v909
      %v911 = vpop.f32.mrf.mxu0
      %v912 = vadd.f32 0.0, %v911
      %913 = vdwg.mxu0
      %v914 = vmax.f32 %v835, 0.0
      %v915 = vmax.f32 %v837, 0.0
      %v916 = vmax.f32 %v840, 0.0
      %v917 = vmax.f32 %v842, 0.0
      %v918 = vmax.f32 %v845, 0.0
      %v919 = vmax.f32 %v847, 0.0
      %v920 = vmax.f32 %v850, 0.0
      %v921 = vmax.f32 %v852, 0.0
      %v922 = vmax.f32 %v855, 0.0
      %v923 = vmax.f32 %v857, 0.0
      %v924 = vmax.f32 %v860, 0.0
      %v925 = vmax.f32 %v862, 0.0
      %v926 = vmax.f32 %v865, 0.0
      %v927 = vmax.f32 %v867, 0.0
      %v928 = vmax.f32 %v870, 0.0
      %v929 = vmax.f32 %v872, 0.0
      %v930 = vmax.f32 %v875, 0.0
      %v931 = vmax.f32 %v877, 0.0
      %v932 = vmax.f32 %v880, 0.0
      %v933 = vmax.f32 %v882, 0.0
      %v934 = vmax.f32 %v885, 0.0
      %v935 = vmax.f32 %v887, 0.0
      %v936 = vmax.f32 %v890, 0.0
      %v937 = vmax.f32 %v892, 0.0
      %v938 = vmax.f32 %v895, 0.0
      %v939 = vmax.f32 %v897, 0.0
      %v940 = vmax.f32 %v900, 0.0
      %v941 = vmax.f32 %v902, 0.0
      %v942 = vmax.f32 %v905, 0.0
      %v943 = vmax.f32 %v907, 0.0
      %v944 = vmax.f32 %v910, 0.0
      %v945 = vmax.f32 %v912, 0.0
      %v946 = vld [vmem:[%s3] sm:$0xf]
      %v947 = vld [vmem:[%s3 + $0x4] sm:$0xf]
      %v948 = vld [vmem:[%s3 + $0x8] sm:$0xf]
      %v949 = vld [vmem:[%s3 + $0xc] sm:$0xf]
      %v950 = vpack.c.bf16 %v914, %v914
      %v951 = vpack.c.bf16 %v915, %v915
      %v952 = vpack.c.bf16 %v916, %v916
      %v953 = vpack.c.bf16 %v917, %v917
      %v954 = vpack.c.bf16 %v918, %v918
      %v955 = vpack.c.bf16 %v919, %v919
      %v956 = vpack.c.bf16 %v920, %v920
      %v957 = vpack.c.bf16 %v921, %v921
      %v958 = vpack.c.bf16 %v922, %v922
      %v959 = vpack.c.bf16 %v923, %v923
      %v960 = vpack.c.bf16 %v924, %v924
      %v961 = vpack.c.bf16 %v925, %v925
      %v962 = vpack.c.bf16 %v926, %v926
      %v963 = vpack.c.bf16 %v927, %v927
      %v964 = vpack.c.bf16 %v928, %v928
      %v965 = vpack.c.bf16 %v929, %v929
      %v966 = vpack.c.bf16 %v930, %v930
      %v967 = vpack.c.bf16 %v931, %v931
      %v968 = vpack.c.bf16 %v932, %v932
      %v969 = vpack.c.bf16 %v933, %v933
      %v970 = vpack.c.bf16 %v934, %v934
      %v971 = vpack.c.bf16 %v935, %v935
      %v972 = vpack.c.bf16 %v936, %v936
      %v973 = vpack.c.bf16 %v937, %v937
      %v974 = vpack.c.bf16 %v938, %v938
      %v975 = vpack.c.bf16 %v939, %v939
      %v976 = vpack.c.bf16 %v940, %v940
      %v977 = vpack.c.bf16 %v941, %v941
      %v978 = vpack.c.bf16 %v942, %v942
      %v979 = vpack.c.bf16 %v943, %v943
      %v980 = vpack.c.bf16 %v944, %v944
      %v981 = vpack.c.bf16 %v945, %v945
      %v983 = vsel %vm241, %v950, 0
      %985 = vmatpush.bf16.msra.mxu0 0
      %986 = vmatpush.bf16.msra.mxu0 0
      %987 = vmatpush.bf16.msra.mxu0 0
      %988 = vmatpush.bf16.msra.mxu0 0
      %989 = vmatpush.bf16.msra.mxu0 0
      %990 = vmatpush.bf16.msra.mxu0 0
      %991 = vmatpush.bf16.msra.mxu0 0
      %992 = vmatpush.bf16.msra.mxu0 %v983
      %993 = vmatmul.bf16.gmra.mxu0 %v239
      %v994 = vpop.f32.mrf.mxu0
      %v995 = vadd.f32 0.0, %v994
      %v996 = vpop.f32.mrf.mxu0
      %997 = vdwg.mxu0
      %v999 = vsel %vm241, %v951, 0
      %1001 = vmatpush.bf16.msra.mxu0 0
      %1002 = vmatpush.bf16.msra.mxu0 0
      %1003 = vmatpush.bf16.msra.mxu0 0
      %1004 = vmatpush.bf16.msra.mxu0 0
      %1005 = vmatpush.bf16.msra.mxu0 0
      %1006 = vmatpush.bf16.msra.mxu0 0
      %1007 = vmatpush.bf16.msra.mxu0 0
      %1008 = vmatpush.bf16.msra.mxu0 %v999
      %1009 = vmatmul.bf16.gmra.mxu0 %v239
      %v1010 = vpop.f32.mrf.mxu0
      %v1011 = vadd.f32 0.0, %v1010
      %v1012 = vpop.f32.mrf.mxu0
      %1013 = vdwg.mxu0
      %v1015 = vsel %vm241, %v952, 0
      %1017 = vmatpush.bf16.msra.mxu0 0
      %1018 = vmatpush.bf16.msra.mxu0 0
      %1019 = vmatpush.bf16.msra.mxu0 0
      %1020 = vmatpush.bf16.msra.mxu0 0
      %1021 = vmatpush.bf16.msra.mxu0 0
      %1022 = vmatpush.bf16.msra.mxu0 0
      %1023 = vmatpush.bf16.msra.mxu0 0
      %1024 = vmatpush.bf16.msra.mxu0 %v1015
      %1025 = vmatmul.bf16.gmra.mxu0 %v239
      %v1026 = vpop.f32.mrf.mxu0
      %v1027 = vadd.f32 0.0, %v1026
      %v1028 = vpop.f32.mrf.mxu0
      %1029 = vdwg.mxu0
      %v1031 = vsel %vm241, %v953, 0
      %1033 = vmatpush.bf16.msra.mxu0 0
      %1034 = vmatpush.bf16.msra.mxu0 0
      %1035 = vmatpush.bf16.msra.mxu0 0
      %1036 = vmatpush.bf16.msra.mxu0 0
      %1037 = vmatpush.bf16.msra.mxu0 0
      %1038 = vmatpush.bf16.msra.mxu0 0
      %1039 = vmatpush.bf16.msra.mxu0 0
      %1040 = vmatpush.bf16.msra.mxu0 %v1031
      %1041 = vmatmul.bf16.gmra.mxu0 %v239
      %v1042 = vpop.f32.mrf.mxu0
      %v1043 = vadd.f32 0.0, %v1042
      %v1044 = vpop.f32.mrf.mxu0
      %1045 = vdwg.mxu0
      %v1047 = vsel %vm241, %v954, 0
      %1049 = vmatpush.bf16.msra.mxu0 0
      %1050 = vmatpush.bf16.msra.mxu0 0
      %1051 = vmatpush.bf16.msra.mxu0 0
      %1052 = vmatpush.bf16.msra.mxu0 0
      %1053 = vmatpush.bf16.msra.mxu0 0
      %1054 = vmatpush.bf16.msra.mxu0 0
      %1055 = vmatpush.bf16.msra.mxu0 0
      %1056 = vmatpush.bf16.msra.mxu0 %v1047
      %1057 = vmatmul.bf16.gmra.mxu0 %v239
      %v1058 = vpop.f32.mrf.mxu0
      %v1059 = vadd.f32 0.0, %v1058
      %v1060 = vpop.f32.mrf.mxu0
      %1061 = vdwg.mxu0
      %v1063 = vsel %vm241, %v955, 0
      %1065 = vmatpush.bf16.msra.mxu0 0
      %1066 = vmatpush.bf16.msra.mxu0 0
      %1067 = vmatpush.bf16.msra.mxu0 0
      %1068 = vmatpush.bf16.msra.mxu0 0
      %1069 = vmatpush.bf16.msra.mxu0 0
      %1070 = vmatpush.bf16.msra.mxu0 0
      %1071 = vmatpush.bf16.msra.mxu0 0
      %1072 = vmatpush.bf16.msra.mxu0 %v1063
      %1073 = vmatmul.bf16.gmra.mxu0 %v239
      %v1074 = vpop.f32.mrf.mxu0
      %v1075 = vadd.f32 0.0, %v1074
      %v1076 = vpop.f32.mrf.mxu0
      %1077 = vdwg.mxu0
      %v1079 = vsel %vm241, %v956, 0
      %1081 = vmatpush.bf16.msra.mxu0 0
      %1082 = vmatpush.bf16.msra.mxu0 0
      %1083 = vmatpush.bf16.msra.mxu0 0
      %1084 = vmatpush.bf16.msra.mxu0 0
      %1085 = vmatpush.bf16.msra.mxu0 0
      %1086 = vmatpush.bf16.msra.mxu0 0
      %1087 = vmatpush.bf16.msra.mxu0 0
      %1088 = vmatpush.bf16.msra.mxu0 %v1079
      %1089 = vmatmul.bf16.gmra.mxu0 %v239
      %v1090 = vpop.f32.mrf.mxu0
      %v1091 = vadd.f32 0.0, %v1090
      %v1092 = vpop.f32.mrf.mxu0
      %1093 = vdwg.mxu0
      %v1095 = vsel %vm241, %v957, 0
      %1097 = vmatpush.bf16.msra.mxu0 0
      %1098 = vmatpush.bf16.msra.mxu0 0
      %1099 = vmatpush.bf16.msra.mxu0 0
      %1100 = vmatpush.bf16.msra.mxu0 0
      %1101 = vmatpush.bf16.msra.mxu0 0
      %1102 = vmatpush.bf16.msra.mxu0 0
      %1103 = vmatpush.bf16.msra.mxu0 0
      %1104 = vmatpush.bf16.msra.mxu0 %v1095
      %1105 = vmatmul.bf16.gmra.mxu0 %v239
      %v1106 = vpop.f32.mrf.mxu0
      %v1107 = vadd.f32 0.0, %v1106
      %v1108 = vpop.f32.mrf.mxu0
      %1109 = vdwg.mxu0
      %v1111 = vsel %vm241, %v958, 0
      %1113 = vmatpush.bf16.msra.mxu0 0
      %1114 = vmatpush.bf16.msra.mxu0 0
      %1115 = vmatpush.bf16.msra.mxu0 0
      %1116 = vmatpush.bf16.msra.mxu0 0
      %1117 = vmatpush.bf16.msra.mxu0 0
      %1118 = vmatpush.bf16.msra.mxu0 0
      %1119 = vmatpush.bf16.msra.mxu0 0
      %1120 = vmatpush.bf16.msra.mxu0 %v1111
      %1121 = vmatmul.bf16.gmra.mxu0 %v239
      %v1122 = vpop.f32.mrf.mxu0
      %v1123 = vadd.f32 0.0, %v1122
      %v1124 = vpop.f32.mrf.mxu0
      %1125 = vdwg.mxu0
      %v1127 = vsel %vm241, %v959, 0
      %1129 = vmatpush.bf16.msra.mxu0 0
      %1130 = vmatpush.bf16.msra.mxu0 0
      %1131 = vmatpush.bf16.msra.mxu0 0
      %1132 = vmatpush.bf16.msra.mxu0 0
      %1133 = vmatpush.bf16.msra.mxu0 0
      %1134 = vmatpush.bf16.msra.mxu0 0
      %1135 = vmatpush.bf16.msra.mxu0 0
      %1136 = vmatpush.bf16.msra.mxu0 %v1127
      %1137 = vmatmul.bf16.gmra.mxu0 %v239
      %v1138 = vpop.f32.mrf.mxu0
      %v1139 = vadd.f32 0.0, %v1138
      %v1140 = vpop.f32.mrf.mxu0
      %1141 = vdwg.mxu0
      %v1143 = vsel %vm241, %v960, 0
      %1145 = vmatpush.bf16.msra.mxu0 0
      %1146 = vmatpush.bf16.msra.mxu0 0
      %1147 = vmatpush.bf16.msra.mxu0 0
      %1148 = vmatpush.bf16.msra.mxu0 0
      %1149 = vmatpush.bf16.msra.mxu0 0
      %1150 = vmatpush.bf16.msra.mxu0 0
      %1151 = vmatpush.bf16.msra.mxu0 0
      %1152 = vmatpush.bf16.msra.mxu0 %v1143
      %1153 = vmatmul.bf16.gmra.mxu0 %v239
      %v1154 = vpop.f32.mrf.mxu0
      %v1155 = vadd.f32 0.0, %v1154
      %v1156 = vpop.f32.mrf.mxu0
      %1157 = vdwg.mxu0
      %v1159 = vsel %vm241, %v961, 0
      %1161 = vmatpush.bf16.msra.mxu0 0
      %1162 = vmatpush.bf16.msra.mxu0 0
      %1163 = vmatpush.bf16.msra.mxu0 0
      %1164 = vmatpush.bf16.msra.mxu0 0
      %1165 = vmatpush.bf16.msra.mxu0 0
      %1166 = vmatpush.bf16.msra.mxu0 0
      %1167 = vmatpush.bf16.msra.mxu0 0
      %1168 = vmatpush.bf16.msra.mxu0 %v1159
      %1169 = vmatmul.bf16.gmra.mxu0 %v239
      %v1170 = vpop.f32.mrf.mxu0
      %v1171 = vadd.f32 0.0, %v1170
      %v1172 = vpop.f32.mrf.mxu0
      %1173 = vdwg.mxu0
      %v1175 = vsel %vm241, %v962, 0
      %1177 = vmatpush.bf16.msra.mxu0 0
      %1178 = vmatpush.bf16.msra.mxu0 0
      %1179 = vmatpush.bf16.msra.mxu0 0
      %1180 = vmatpush.bf16.msra.mxu0 0
      %1181 = vmatpush.bf16.msra.mxu0 0
      %1182 = vmatpush.bf16.msra.mxu0 0
      %1183 = vmatpush.bf16.msra.mxu0 0
      %1184 = vmatpush.bf16.msra.mxu0 %v1175
      %1185 = vmatmul.bf16.gmra.mxu0 %v239
      %v1186 = vpop.f32.mrf.mxu0
      %v1187 = vadd.f32 0.0, %v1186
      %v1188 = vpop.f32.mrf.mxu0
      %1189 = vdwg.mxu0
      %v1191 = vsel %vm241, %v963, 0
      %1193 = vmatpush.bf16.msra.mxu0 0
      %1194 = vmatpush.bf16.msra.mxu0 0
      %1195 = vmatpush.bf16.msra.mxu0 0
      %1196 = vmatpush.bf16.msra.mxu0 0
      %1197 = vmatpush.bf16.msra.mxu0 0
      %1198 = vmatpush.bf16.msra.mxu0 0
      %1199 = vmatpush.bf16.msra.mxu0 0
      %1200 = vmatpush.bf16.msra.mxu0 %v1191
      %1201 = vmatmul.bf16.gmra.mxu0 %v239
      %v1202 = vpop.f32.mrf.mxu0
      %v1203 = vadd.f32 0.0, %v1202
      %v1204 = vpop.f32.mrf.mxu0
      %1205 = vdwg.mxu0
      %v1207 = vsel %vm241, %v964, 0
      %1209 = vmatpush.bf16.msra.mxu0 0
      %1210 = vmatpush.bf16.msra.mxu0 0
      %1211 = vmatpush.bf16.msra.mxu0 0
      %1212 = vmatpush.bf16.msra.mxu0 0
      %1213 = vmatpush.bf16.msra.mxu0 0
      %1214 = vmatpush.bf16.msra.mxu0 0
      %1215 = vmatpush.bf16.msra.mxu0 0
      %1216 = vmatpush.bf16.msra.mxu0 %v1207
      %1217 = vmatmul.bf16.gmra.mxu0 %v239
      %v1218 = vpop.f32.mrf.mxu0
      %v1219 = vadd.f32 0.0, %v1218
      %v1220 = vpop.f32.mrf.mxu0
      %1221 = vdwg.mxu0
      %v1223 = vsel %vm241, %v965, 0
      %1225 = vmatpush.bf16.msra.mxu0 0
      %1226 = vmatpush.bf16.msra.mxu0 0
      %1227 = vmatpush.bf16.msra.mxu0 0
      %1228 = vmatpush.bf16.msra.mxu0 0
      %1229 = vmatpush.bf16.msra.mxu0 0
      %1230 = vmatpush.bf16.msra.mxu0 0
      %1231 = vmatpush.bf16.msra.mxu0 0
      %1232 = vmatpush.bf16.msra.mxu0 %v1223
      %1233 = vmatmul.bf16.gmra.mxu0 %v239
      %v1234 = vpop.f32.mrf.mxu0
      %v1235 = vadd.f32 0.0, %v1234
      %v1236 = vpop.f32.mrf.mxu0
      %1237 = vdwg.mxu0
      %v1239 = vsel %vm241, %v966, 0
      %1241 = vmatpush.bf16.msra.mxu0 0
      %1242 = vmatpush.bf16.msra.mxu0 0
      %1243 = vmatpush.bf16.msra.mxu0 0
      %1244 = vmatpush.bf16.msra.mxu0 0
      %1245 = vmatpush.bf16.msra.mxu0 0
      %1246 = vmatpush.bf16.msra.mxu0 0
      %1247 = vmatpush.bf16.msra.mxu0 0
      %1248 = vmatpush.bf16.msra.mxu0 %v1239
      %1249 = vmatmul.bf16.gmra.mxu0 %v239
      %v1250 = vpop.f32.mrf.mxu0
      %v1251 = vadd.f32 0.0, %v1250
      %v1252 = vpop.f32.mrf.mxu0
      %1253 = vdwg.mxu0
      %v1255 = vsel %vm241, %v967, 0
      %1257 = vmatpush.bf16.msra.mxu0 0
      %1258 = vmatpush.bf16.msra.mxu0 0
      %1259 = vmatpush.bf16.msra.mxu0 0
      %1260 = vmatpush.bf16.msra.mxu0 0
      %1261 = vmatpush.bf16.msra.mxu0 0
      %1262 = vmatpush.bf16.msra.mxu0 0
      %1263 = vmatpush.bf16.msra.mxu0 0
      %1264 = vmatpush.bf16.msra.mxu0 %v1255
      %1265 = vmatmul.bf16.gmra.mxu0 %v239
      %v1266 = vpop.f32.mrf.mxu0
      %v1267 = vadd.f32 0.0, %v1266
      %v1268 = vpop.f32.mrf.mxu0
      %1269 = vdwg.mxu0
      %v1271 = vsel %vm241, %v968, 0
      %1273 = vmatpush.bf16.msra.mxu0 0
      %1274 = vmatpush.bf16.msra.mxu0 0
      %1275 = vmatpush.bf16.msra.mxu0 0
      %1276 = vmatpush.bf16.msra.mxu0 0
      %1277 = vmatpush.bf16.msra.mxu0 0
      %1278 = vmatpush.bf16.msra.mxu0 0
      %1279 = vmatpush.bf16.msra.mxu0 0
      %1280 = vmatpush.bf16.msra.mxu0 %v1271
      %1281 = vmatmul.bf16.gmra.mxu0 %v239
      %v1282 = vpop.f32.mrf.mxu0
      %v1283 = vadd.f32 0.0, %v1282
      %v1284 = vpop.f32.mrf.mxu0
      %1285 = vdwg.mxu0
      %v1287 = vsel %vm241, %v969, 0
      %1289 = vmatpush.bf16.msra.mxu0 0
      %1290 = vmatpush.bf16.msra.mxu0 0
      %1291 = vmatpush.bf16.msra.mxu0 0
      %1292 = vmatpush.bf16.msra.mxu0 0
      %1293 = vmatpush.bf16.msra.mxu0 0
      %1294 = vmatpush.bf16.msra.mxu0 0
      %1295 = vmatpush.bf16.msra.mxu0 0
      %1296 = vmatpush.bf16.msra.mxu0 %v1287
      %1297 = vmatmul.bf16.gmra.mxu0 %v239
      %v1298 = vpop.f32.mrf.mxu0
      %v1299 = vadd.f32 0.0, %v1298
      %v1300 = vpop.f32.mrf.mxu0
      %1301 = vdwg.mxu0
      %v1303 = vsel %vm241, %v970, 0
      %1305 = vmatpush.bf16.msra.mxu0 0
      %1306 = vmatpush.bf16.msra.mxu0 0
      %1307 = vmatpush.bf16.msra.mxu0 0
      %1308 = vmatpush.bf16.msra.mxu0 0
      %1309 = vmatpush.bf16.msra.mxu0 0
      %1310 = vmatpush.bf16.msra.mxu0 0
      %1311 = vmatpush.bf16.msra.mxu0 0
      %1312 = vmatpush.bf16.msra.mxu0 %v1303
      %1313 = vmatmul.bf16.gmra.mxu0 %v239
      %v1314 = vpop.f32.mrf.mxu0
      %v1315 = vadd.f32 0.0, %v1314
      %v1316 = vpop.f32.mrf.mxu0
      %1317 = vdwg.mxu0
      %v1319 = vsel %vm241, %v971, 0
      %1321 = vmatpush.bf16.msra.mxu0 0
      %1322 = vmatpush.bf16.msra.mxu0 0
      %1323 = vmatpush.bf16.msra.mxu0 0
      %1324 = vmatpush.bf16.msra.mxu0 0
      %1325 = vmatpush.bf16.msra.mxu0 0
      %1326 = vmatpush.bf16.msra.mxu0 0
      %1327 = vmatpush.bf16.msra.mxu0 0
      %1328 = vmatpush.bf16.msra.mxu0 %v1319
      %1329 = vmatmul.bf16.gmra.mxu0 %v239
      %v1330 = vpop.f32.mrf.mxu0
      %v1331 = vadd.f32 0.0, %v1330
      %v1332 = vpop.f32.mrf.mxu0
      %1333 = vdwg.mxu0
      %v1335 = vsel %vm241, %v972, 0
      %1337 = vmatpush.bf16.msra.mxu0 0
      %1338 = vmatpush.bf16.msra.mxu0 0
      %1339 = vmatpush.bf16.msra.mxu0 0
      %1340 = vmatpush.bf16.msra.mxu0 0
      %1341 = vmatpush.bf16.msra.mxu0 0
      %1342 = vmatpush.bf16.msra.mxu0 0
      %1343 = vmatpush.bf16.msra.mxu0 0
      %1344 = vmatpush.bf16.msra.mxu0 %v1335
      %1345 = vmatmul.bf16.gmra.mxu0 %v239
      %v1346 = vpop.f32.mrf.mxu0
      %v1347 = vadd.f32 0.0, %v1346
      %v1348 = vpop.f32.mrf.mxu0
      %1349 = vdwg.mxu0
      %v1351 = vsel %vm241, %v973, 0
      %1353 = vmatpush.bf16.msra.mxu0 0
      %1354 = vmatpush.bf16.msra.mxu0 0
      %1355 = vmatpush.bf16.msra.mxu0 0
      %1356 = vmatpush.bf16.msra.mxu0 0
      %1357 = vmatpush.bf16.msra.mxu0 0
      %1358 = vmatpush.bf16.msra.mxu0 0
      %1359 = vmatpush.bf16.msra.mxu0 0
      %1360 = vmatpush.bf16.msra.mxu0 %v1351
      %1361 = vmatmul.bf16.gmra.mxu0 %v239
      %v1362 = vpop.f32.mrf.mxu0
      %v1363 = vadd.f32 0.0, %v1362
      %v1364 = vpop.f32.mrf.mxu0
      %1365 = vdwg.mxu0
      %v1367 = vsel %vm241, %v974, 0
      %1369 = vmatpush.bf16.msra.mxu0 0
      %1370 = vmatpush.bf16.msra.mxu0 0
      %1371 = vmatpush.bf16.msra.mxu0 0
      %1372 = vmatpush.bf16.msra.mxu0 0
      %1373 = vmatpush.bf16.msra.mxu0 0
      %1374 = vmatpush.bf16.msra.mxu0 0
      %1375 = vmatpush.bf16.msra.mxu0 0
      %1376 = vmatpush.bf16.msra.mxu0 %v1367
      %1377 = vmatmul.bf16.gmra.mxu0 %v239
      %v1378 = vpop.f32.mrf.mxu0
      %v1379 = vadd.f32 0.0, %v1378
      %v1380 = vpop.f32.mrf.mxu0
      %1381 = vdwg.mxu0
      %v1383 = vsel %vm241, %v975, 0
      %1385 = vmatpush.bf16.msra.mxu0 0
      %1386 = vmatpush.bf16.msra.mxu0 0
      %1387 = vmatpush.bf16.msra.mxu0 0
      %1388 = vmatpush.bf16.msra.mxu0 0
      %1389 = vmatpush.bf16.msra.mxu0 0
      %1390 = vmatpush.bf16.msra.mxu0 0
      %1391 = vmatpush.bf16.msra.mxu0 0
      %1392 = vmatpush.bf16.msra.mxu0 %v1383
      %1393 = vmatmul.bf16.gmra.mxu0 %v239
      %v1394 = vpop.f32.mrf.mxu0
      %v1395 = vadd.f32 0.0, %v1394
      %v1396 = vpop.f32.mrf.mxu0
      %1397 = vdwg.mxu0
      %v1399 = vsel %vm241, %v976, 0
      %1401 = vmatpush.bf16.msra.mxu0 0
      %1402 = vmatpush.bf16.msra.mxu0 0
      %1403 = vmatpush.bf16.msra.mxu0 0
      %1404 = vmatpush.bf16.msra.mxu0 0
      %1405 = vmatpush.bf16.msra.mxu0 0
      %1406 = vmatpush.bf16.msra.mxu0 0
      %1407 = vmatpush.bf16.msra.mxu0 0
      %1408 = vmatpush.bf16.msra.mxu0 %v1399
      %1409 = vmatmul.bf16.gmra.mxu0 %v239
      %v1410 = vpop.f32.mrf.mxu0
      %v1411 = vadd.f32 0.0, %v1410
      %v1412 = vpop.f32.mrf.mxu0
      %1413 = vdwg.mxu0
      %v1415 = vsel %vm241, %v977, 0
      %1417 = vmatpush.bf16.msra.mxu0 0
      %1418 = vmatpush.bf16.msra.mxu0 0
      %1419 = vmatpush.bf16.msra.mxu0 0
      %1420 = vmatpush.bf16.msra.mxu0 0
      %1421 = vmatpush.bf16.msra.mxu0 0
      %1422 = vmatpush.bf16.msra.mxu0 0
      %1423 = vmatpush.bf16.msra.mxu0 0
      %1424 = vmatpush.bf16.msra.mxu0 %v1415
      %1425 = vmatmul.bf16.gmra.mxu0 %v239
      %v1426 = vpop.f32.mrf.mxu0
      %v1427 = vadd.f32 0.0, %v1426
      %v1428 = vpop.f32.mrf.mxu0
      %1429 = vdwg.mxu0
      %v1431 = vsel %vm241, %v978, 0
      %1433 = vmatpush.bf16.msra.mxu0 0
      %1434 = vmatpush.bf16.msra.mxu0 0
      %1435 = vmatpush.bf16.msra.mxu0 0
      %1436 = vmatpush.bf16.msra.mxu0 0
      %1437 = vmatpush.bf16.msra.mxu0 0
      %1438 = vmatpush.bf16.msra.mxu0 0
      %1439 = vmatpush.bf16.msra.mxu0 0
      %1440 = vmatpush.bf16.msra.mxu0 %v1431
      %1441 = vmatmul.bf16.gmra.mxu0 %v239
      %v1442 = vpop.f32.mrf.mxu0
      %v1443 = vadd.f32 0.0, %v1442
      %v1444 = vpop.f32.mrf.mxu0
      %1445 = vdwg.mxu0
      %v1447 = vsel %vm241, %v979, 0
      %1449 = vmatpush.bf16.msra.mxu0 0
      %1450 = vmatpush.bf16.msra.mxu0 0
      %1451 = vmatpush.bf16.msra.mxu0 0
      %1452 = vmatpush.bf16.msra.mxu0 0
      %1453 = vmatpush.bf16.msra.mxu0 0
      %1454 = vmatpush.bf16.msra.mxu0 0
      %1455 = vmatpush.bf16.msra.mxu0 0
      %1456 = vmatpush.bf16.msra.mxu0 %v1447
      %1457 = vmatmul.bf16.gmra.mxu0 %v239
      %v1458 = vpop.f32.mrf.mxu0
      %v1459 = vadd.f32 0.0, %v1458
      %v1460 = vpop.f32.mrf.mxu0
      %1461 = vdwg.mxu0
      %v1463 = vsel %vm241, %v980, 0
      %1465 = vmatpush.bf16.msra.mxu0 0
      %1466 = vmatpush.bf16.msra.mxu0 0
      %1467 = vmatpush.bf16.msra.mxu0 0
      %1468 = vmatpush.bf16.msra.mxu0 0
      %1469 = vmatpush.bf16.msra.mxu0 0
      %1470 = vmatpush.bf16.msra.mxu0 0
      %1471 = vmatpush.bf16.msra.mxu0 0
      %1472 = vmatpush.bf16.msra.mxu0 %v1463
      %1473 = vmatmul.bf16.gmra.mxu0 %v239
      %v1474 = vpop.f32.mrf.mxu0
      %v1475 = vadd.f32 0.0, %v1474
      %v1476 = vpop.f32.mrf.mxu0
      %1477 = vdwg.mxu0
      %v1479 = vsel %vm241, %v981, 0
      %1481 = vmatpush.bf16.msra.mxu0 0
      %1482 = vmatpush.bf16.msra.mxu0 0
      %1483 = vmatpush.bf16.msra.mxu0 0
      %1484 = vmatpush.bf16.msra.mxu0 0
      %1485 = vmatpush.bf16.msra.mxu0 0
      %1486 = vmatpush.bf16.msra.mxu0 0
      %1487 = vmatpush.bf16.msra.mxu0 0
      %1488 = vmatpush.bf16.msra.mxu0 %v1479
      %1489 = vmatmul.bf16.gmra.mxu0 %v239
      %v1490 = vpop.f32.mrf.mxu0
      %v1491 = vadd.f32 0.0, %v1490
      %v1492 = vpop.f32.mrf.mxu0
      %1493 = vdwg.mxu0
      %v1494 = vpack.c.bf16 %v1011, %v995
      %v1495 = vpack.c.bf16 %v1043, %v1027
      %v1496 = vpack.c.bf16 %v1075, %v1059
      %v1497 = vpack.c.bf16 %v1107, %v1091
      %v1498 = vpack.c.bf16 %v1139, %v1123
      %v1499 = vpack.c.bf16 %v1171, %v1155
      %v1500 = vpack.c.bf16 %v1203, %v1187
      %v1501 = vpack.c.bf16 %v1235, %v1219
      %v1502 = vpack.c.bf16 %v1267, %v1251
      %v1503 = vpack.c.bf16 %v1299, %v1283
      %v1504 = vpack.c.bf16 %v1331, %v1315
      %v1505 = vpack.c.bf16 %v1363, %v1347
      %v1506 = vpack.c.bf16 %v1395, %v1379
      %v1507 = vpack.c.bf16 %v1427, %v1411
      %v1508 = vpack.c.bf16 %v1459, %v1443
      %v1509 = vpack.c.bf16 %v1491, %v1475
      %v1514 = vunpack.c.l.b16 %v946
      %v1515 = vunpack.c.l.b16 %v947
      %v1516 = vunpack.c.l.b16 %v948
      %v1517 = vunpack.c.l.b16 %v949
      %v1518 = vpack.c.b16 %v1515, %v1514
      %v1519 = vpack.c.b16 %v1517, %v1516
      %vm1522 = vcmask 261120
      %v1524 = vsel %vm1522, %v1494, 0
      %v1527 = vsel %vm1522, %v1495, 0
      %v1530 = vsel %vm1522, %v1496, 0
      %v1533 = vsel %vm1522, %v1497, 0
      %v1536 = vsel %vm1522, %v1498, 0
      %v1539 = vsel %vm1522, %v1499, 0
      %v1542 = vsel %vm1522, %v1500, 0
      %v1545 = vsel %vm1522, %v1501, 0
      %v1548 = vsel %vm1522, %v1502, 0
      %v1551 = vsel %vm1522, %v1503, 0
      %v1554 = vsel %vm1522, %v1504, 0
      %v1557 = vsel %vm1522, %v1505, 0
      %v1560 = vsel %vm1522, %v1506, 0
      %v1563 = vsel %vm1522, %v1507, 0
      %v1566 = vsel %vm1522, %v1508, 0
      %v1569 = vsel %vm1522, %v1509, 0
      %1571 = vmatpush.bf16.msra.mxu0 0
      %1572 = vmatpush.bf16.msra.mxu0 0
      %1573 = vmatpush.bf16.msra.mxu0 0
      %1574 = vmatpush.bf16.msra.mxu0 0
      %1575 = vmatpush.bf16.msra.mxu0 0
      %1576 = vmatpush.bf16.msra.mxu0 0
      %1577 = vmatpush.bf16.msra.mxu0 %v1519
      %1578 = vmatpush.bf16.msra.mxu0 %v1518
      %1579 = vmatmul.bf16.gmra.mxu0 %v1524
      %v1580 = vpop.f32.mrf.mxu0
      %v1581 = vadd.f32 0.0, %v1580
      %v1582 = vpop.f32.mrf.mxu0
      %v1583 = vadd.f32 0.0, %v1582
      %1584 = vmatmul.bf16.gmra.mxu0 %v1527
      %v1585 = vpop.f32.mrf.mxu0
      %v1586 = vadd.f32 0.0, %v1585
      %v1587 = vpop.f32.mrf.mxu0
      %v1588 = vadd.f32 0.0, %v1587
      %1589 = vmatmul.bf16.gmra.mxu0 %v1530
      %v1590 = vpop.f32.mrf.mxu0
      %v1591 = vadd.f32 0.0, %v1590
      %v1592 = vpop.f32.mrf.mxu0
      %v1593 = vadd.f32 0.0, %v1592
      %1594 = vmatmul.bf16.gmra.mxu0 %v1533
      %v1595 = vpop.f32.mrf.mxu0
      %v1596 = vadd.f32 0.0, %v1595
      %v1597 = vpop.f32.mrf.mxu0
      %v1598 = vadd.f32 0.0, %v1597
      %1599 = vmatmul.bf16.gmra.mxu0 %v1536
      %v1600 = vpop.f32.mrf.mxu0
      %v1601 = vadd.f32 0.0, %v1600
      %v1602 = vpop.f32.mrf.mxu0
      %v1603 = vadd.f32 0.0, %v1602
      %1604 = vmatmul.bf16.gmra.mxu0 %v1539
      %v1605 = vpop.f32.mrf.mxu0
      %v1606 = vadd.f32 0.0, %v1605
      %v1607 = vpop.f32.mrf.mxu0
      %v1608 = vadd.f32 0.0, %v1607
      %1609 = vmatmul.bf16.gmra.mxu0 %v1542
      %v1610 = vpop.f32.mrf.mxu0
      %v1611 = vadd.f32 0.0, %v1610
      %v1612 = vpop.f32.mrf.mxu0
      %v1613 = vadd.f32 0.0, %v1612
      %1614 = vmatmul.bf16.gmra.mxu0 %v1545
      %v1615 = vpop.f32.mrf.mxu0
      %v1616 = vadd.f32 0.0, %v1615
      %v1617 = vpop.f32.mrf.mxu0
      %v1618 = vadd.f32 0.0, %v1617
      %1619 = vmatmul.bf16.gmra.mxu0 %v1548
      %v1620 = vpop.f32.mrf.mxu0
      %v1621 = vadd.f32 0.0, %v1620
      %v1622 = vpop.f32.mrf.mxu0
      %v1623 = vadd.f32 0.0, %v1622
      %1624 = vmatmul.bf16.gmra.mxu0 %v1551
      %v1625 = vpop.f32.mrf.mxu0
      %v1626 = vadd.f32 0.0, %v1625
      %v1627 = vpop.f32.mrf.mxu0
      %v1628 = vadd.f32 0.0, %v1627
      %1629 = vmatmul.bf16.gmra.mxu0 %v1554
      %v1630 = vpop.f32.mrf.mxu0
      %v1631 = vadd.f32 0.0, %v1630
      %v1632 = vpop.f32.mrf.mxu0
      %v1633 = vadd.f32 0.0, %v1632
      %1634 = vmatmul.bf16.gmra.mxu0 %v1557
      %v1635 = vpop.f32.mrf.mxu0
      %v1636 = vadd.f32 0.0, %v1635
      %v1637 = vpop.f32.mrf.mxu0
      %v1638 = vadd.f32 0.0, %v1637
      %1639 = vmatmul.bf16.gmra.mxu0 %v1560
      %v1640 = vpop.f32.mrf.mxu0
      %v1641 = vadd.f32 0.0, %v1640
      %v1642 = vpop.f32.mrf.mxu0
      %v1643 = vadd.f32 0.0, %v1642
      %1644 = vmatmul.bf16.gmra.mxu0 %v1563
      %v1645 = vpop.f32.mrf.mxu0
      %v1646 = vadd.f32 0.0, %v1645
      %v1647 = vpop.f32.mrf.mxu0
      %v1648 = vadd.f32 0.0, %v1647
      %1649 = vmatmul.bf16.gmra.mxu0 %v1566
      %v1650 = vpop.f32.mrf.mxu0
      %v1651 = vadd.f32 0.0, %v1650
      %v1652 = vpop.f32.mrf.mxu0
      %v1653 = vadd.f32 0.0, %v1652
      %1654 = vmatmul.bf16.gmra.mxu0 %v1569
      %v1655 = vpop.f32.mrf.mxu0
      %v1656 = vadd.f32 0.0, %v1655
      %v1657 = vpop.f32.mrf.mxu0
      %v1658 = vadd.f32 0.0, %v1657
      %1659 = vdwg.mxu0
      %v1660 = vsel %vm237, %v1581, -inf
      %1661 = vmax.xlane.f32.xlu0 %v1660
      %v1662 = vpop.xlane.xlu0 %1661
      %v1663 = vsel %vm237, %v1583, -inf
      %1664 = vmax.xlane.f32.xlu0 %v1663
      %v1665 = vpop.xlane.xlu0 %1664
      %v1666 = vsel %vm237, %v1586, -inf
      %1667 = vmax.xlane.f32.xlu0 %v1666
      %v1668 = vpop.xlane.xlu0 %1667
      %v1669 = vsel %vm237, %v1588, -inf
      %1670 = vmax.xlane.f32.xlu0 %v1669
      %v1671 = vpop.xlane.xlu0 %1670
      %v1672 = vsel %vm237, %v1591, -inf
      %1673 = vmax.xlane.f32.xlu0 %v1672
      %v1674 = vpop.xlane.xlu0 %1673
      %v1675 = vsel %vm237, %v1593, -inf
      %1676 = vmax.xlane.f32.xlu0 %v1675
      %v1677 = vpop.xlane.xlu0 %1676
      %v1678 = vsel %vm237, %v1596, -inf
      %1679 = vmax.xlane.f32.xlu0 %v1678
      %v1680 = vpop.xlane.xlu0 %1679
      %v1681 = vsel %vm237, %v1598, -inf
      %1682 = vmax.xlane.f32.xlu0 %v1681
      %v1683 = vpop.xlane.xlu0 %1682
      %v1684 = vsel %vm237, %v1601, -inf
      %1685 = vmax.xlane.f32.xlu0 %v1684
      %v1686 = vpop.xlane.xlu0 %1685
      %v1687 = vsel %vm237, %v1603, -inf
      %1688 = vmax.xlane.f32.xlu0 %v1687
      %v1689 = vpop.xlane.xlu0 %1688
      %v1690 = vsel %vm237, %v1606, -inf
      %1691 = vmax.xlane.f32.xlu0 %v1690
      %v1692 = vpop.xlane.xlu0 %1691
      %v1693 = vsel %vm237, %v1608, -inf
      %1694 = vmax.xlane.f32.xlu0 %v1693
      %v1695 = vpop.xlane.xlu0 %1694
      %v1696 = vsel %vm237, %v1611, -inf
      %1697 = vmax.xlane.f32.xlu0 %v1696
      %v1698 = vpop.xlane.xlu0 %1697
      %v1699 = vsel %vm237, %v1613, -inf
      %1700 = vmax.xlane.f32.xlu0 %v1699
      %v1701 = vpop.xlane.xlu0 %1700
      %v1702 = vsel %vm237, %v1616, -inf
      %1703 = vmax.xlane.f32.xlu0 %v1702
      %v1704 = vpop.xlane.xlu0 %1703
      %v1705 = vsel %vm237, %v1618, -inf
      %1706 = vmax.xlane.f32.xlu0 %v1705
      %v1707 = vpop.xlane.xlu0 %1706
      %v1708 = vsel %vm237, %v1621, -inf
      %1709 = vmax.xlane.f32.xlu0 %v1708
      %v1710 = vpop.xlane.xlu0 %1709
      %v1711 = vsel %vm237, %v1623, -inf
      %1712 = vmax.xlane.f32.xlu0 %v1711
      %v1713 = vpop.xlane.xlu0 %1712
      %v1714 = vsel %vm237, %v1626, -inf
      %1715 = vmax.xlane.f32.xlu0 %v1714
      %v1716 = vpop.xlane.xlu0 %1715
      %v1717 = vsel %vm237, %v1628, -inf
      %1718 = vmax.xlane.f32.xlu0 %v1717
      %v1719 = vpop.xlane.xlu0 %1718
      %v1720 = vsel %vm237, %v1631, -inf
      %1721 = vmax.xlane.f32.xlu0 %v1720
      %v1722 = vpop.xlane.xlu0 %1721
      %v1723 = vsel %vm237, %v1633, -inf
      %1724 = vmax.xlane.f32.xlu0 %v1723
      %v1725 = vpop.xlane.xlu0 %1724
      %v1726 = vsel %vm237, %v1636, -inf
      %1727 = vmax.xlane.f32.xlu0 %v1726
      %v1728 = vpop.xlane.xlu0 %1727
      %v1729 = vsel %vm237, %v1638, -inf
      %1730 = vmax.xlane.f32.xlu0 %v1729
      %v1731 = vpop.xlane.xlu0 %1730
      %v1732 = vsel %vm237, %v1641, -inf
      %1733 = vmax.xlane.f32.xlu0 %v1732
      %v1734 = vpop.xlane.xlu0 %1733
      %v1735 = vsel %vm237, %v1643, -inf
      %1736 = vmax.xlane.f32.xlu0 %v1735
      %v1737 = vpop.xlane.xlu0 %1736
      %v1738 = vsel %vm237, %v1646, -inf
      %1739 = vmax.xlane.f32.xlu0 %v1738
      %v1740 = vpop.xlane.xlu0 %1739
      %v1741 = vsel %vm237, %v1648, -inf
      %1742 = vmax.xlane.f32.xlu0 %v1741
      %v1743 = vpop.xlane.xlu0 %1742
      %v1744 = vsel %vm237, %v1651, -inf
      %1745 = vmax.xlane.f32.xlu0 %v1744
      %v1746 = vpop.xlane.xlu0 %1745
      %v1747 = vsel %vm237, %v1653, -inf
      %1748 = vmax.xlane.f32.xlu0 %v1747
      %v1749 = vpop.xlane.xlu0 %1748
      %v1750 = vsel %vm237, %v1656, -inf
      %1751 = vmax.xlane.f32.xlu0 %v1750
      %v1752 = vpop.xlane.xlu0 %1751
      %v1753 = vsel %vm237, %v1658, -inf
      %1754 = vmax.xlane.f32.xlu0 %v1753
      %v1755 = vpop.xlane.xlu0 %1754
      %v1756 = vsub.f32 %v1581, %v1662
      %v1757 = vsub.f32 %v1583, %v1665
      %v1758 = vsub.f32 %v1586, %v1668
      %v1759 = vsub.f32 %v1588, %v1671
      %v1760 = vsub.f32 %v1591, %v1674
      %v1761 = vsub.f32 %v1593, %v1677
      %v1762 = vsub.f32 %v1596, %v1680
      %v1763 = vsub.f32 %v1598, %v1683
      %v1764 = vsub.f32 %v1601, %v1686
      %v1765 = vsub.f32 %v1603, %v1689
      %v1766 = vsub.f32 %v1606, %v1692
      %v1767 = vsub.f32 %v1608, %v1695
      %v1768 = vsub.f32 %v1611, %v1698
      %v1769 = vsub.f32 %v1613, %v1701
      %v1770 = vsub.f32 %v1616, %v1704
      %v1771 = vsub.f32 %v1618, %v1707
      %v1772 = vsub.f32 %v1621, %v1710
      %v1773 = vsub.f32 %v1623, %v1713
      %v1774 = vsub.f32 %v1626, %v1716
      %v1775 = vsub.f32 %v1628, %v1719
      %v1776 = vsub.f32 %v1631, %v1722
      %v1777 = vsub.f32 %v1633, %v1725
      %v1778 = vsub.f32 %v1636, %v1728
      %v1779 = vsub.f32 %v1638, %v1731
      %v1780 = vsub.f32 %v1641, %v1734
      %v1781 = vsub.f32 %v1643, %v1737
      %v1782 = vsub.f32 %v1646, %v1740
      %v1783 = vsub.f32 %v1648, %v1743
      %v1784 = vsub.f32 %v1651, %v1746
      %v1785 = vsub.f32 %v1653, %v1749
      %v1786 = vsub.f32 %v1656, %v1752
      %v1787 = vsub.f32 %v1658, %v1755
      %v1788 = vmul.f32 %v1756, 1.442695
      %v1789 = vpow.pop %v1788
      %v1790 = vmul.f32 %v1757, 1.442695
      %v1791 = vpow.pop %v1790
      %v1792 = vmul.f32 %v1758, 1.442695
      %v1793 = vpow.pop %v1792
      %v1794 = vmul.f32 %v1759, 1.442695
      %v1795 = vpow.pop %v1794
      %v1796 = vmul.f32 %v1760, 1.442695
      %v1797 = vpow.pop %v1796
      %v1798 = vmul.f32 %v1761, 1.442695
      %v1799 = vpow.pop %v1798
      %v1800 = vmul.f32 %v1762, 1.442695
      %v1801 = vpow.pop %v1800
      %v1802 = vmul.f32 %v1763, 1.442695
      %v1803 = vpow.pop %v1802
      %v1804 = vmul.f32 %v1764, 1.442695
      %v1805 = vpow.pop %v1804
      %v1806 = vmul.f32 %v1765, 1.442695
      %v1807 = vpow.pop %v1806
      %v1808 = vmul.f32 %v1766, 1.442695
      %v1809 = vpow.pop %v1808
      %v1810 = vmul.f32 %v1767, 1.442695
      %v1811 = vpow.pop %v1810
      %v1812 = vmul.f32 %v1768, 1.442695
      %v1813 = vpow.pop %v1812
      %v1814 = vmul.f32 %v1769, 1.442695
      %v1815 = vpow.pop %v1814
      %v1816 = vmul.f32 %v1770, 1.442695
      %v1817 = vpow.pop %v1816
      %v1818 = vmul.f32 %v1771, 1.442695
      %v1819 = vpow.pop %v1818
      %v1820 = vmul.f32 %v1772, 1.442695
      %v1821 = vpow.pop %v1820
      %v1822 = vmul.f32 %v1773, 1.442695
      %v1823 = vpow.pop %v1822
      %v1824 = vmul.f32 %v1774, 1.442695
      %v1825 = vpow.pop %v1824
      %v1826 = vmul.f32 %v1775, 1.442695
      %v1827 = vpow.pop %v1826
      %v1828 = vmul.f32 %v1776, 1.442695
      %v1829 = vpow.pop %v1828
      %v1830 = vmul.f32 %v1777, 1.442695
      %v1831 = vpow.pop %v1830
      %v1832 = vmul.f32 %v1778, 1.442695
      %v1833 = vpow.pop %v1832
      %v1834 = vmul.f32 %v1779, 1.442695
      %v1835 = vpow.pop %v1834
      %v1836 = vmul.f32 %v1780, 1.442695
      %v1837 = vpow.pop %v1836
      %v1838 = vmul.f32 %v1781, 1.442695
      %v1839 = vpow.pop %v1838
      %v1840 = vmul.f32 %v1782, 1.442695
      %v1841 = vpow.pop %v1840
      %v1842 = vmul.f32 %v1783, 1.442695
      %v1843 = vpow.pop %v1842
      %v1844 = vmul.f32 %v1784, 1.442695
      %v1845 = vpow.pop %v1844
      %v1846 = vmul.f32 %v1785, 1.442695
      %v1847 = vpow.pop %v1846
      %v1848 = vmul.f32 %v1786, 1.442695
      %v1849 = vpow.pop %v1848
      %v1850 = vmul.f32 %v1787, 1.442695
      %v1851 = vpow.pop %v1850
      %v1852 = vsel %vm237, %v1789, 0.0
      %1853 = vadd.xlane.f32.xlu0 %v1852
      %v1854 = vpop.xlane.xlu0 %1853
      %v1855 = vsel %vm237, %v1791, 0.0
      %1856 = vadd.xlane.f32.xlu0 %v1855
      %v1857 = vpop.xlane.xlu0 %1856
      %v1858 = vsel %vm237, %v1793, 0.0
      %1859 = vadd.xlane.f32.xlu0 %v1858
      %v1860 = vpop.xlane.xlu0 %1859
      %v1861 = vsel %vm237, %v1795, 0.0
      %1862 = vadd.xlane.f32.xlu0 %v1861
      %v1863 = vpop.xlane.xlu0 %1862
      %v1864 = vsel %vm237, %v1797, 0.0
      %1865 = vadd.xlane.f32.xlu0 %v1864
      %v1866 = vpop.xlane.xlu0 %1865
      %v1867 = vsel %vm237, %v1799, 0.0
      %1868 = vadd.xlane.f32.xlu0 %v1867
      %v1869 = vpop.xlane.xlu0 %1868
      %v1870 = vsel %vm237, %v1801, 0.0
      %1871 = vadd.xlane.f32.xlu0 %v1870
      %v1872 = vpop.xlane.xlu0 %1871
      %v1873 = vsel %vm237, %v1803, 0.0
      %1874 = vadd.xlane.f32.xlu0 %v1873
      %v1875 = vpop.xlane.xlu0 %1874
      %v1876 = vsel %vm237, %v1805, 0.0
      %1877 = vadd.xlane.f32.xlu0 %v1876
      %v1878 = vpop.xlane.xlu0 %1877
      %v1879 = vsel %vm237, %v1807, 0.0
      %1880 = vadd.xlane.f32.xlu0 %v1879
      %v1881 = vpop.xlane.xlu0 %1880
      %v1882 = vsel %vm237, %v1809, 0.0
      %1883 = vadd.xlane.f32.xlu0 %v1882
      %v1884 = vpop.xlane.xlu0 %1883
      %v1885 = vsel %vm237, %v1811, 0.0
      %1886 = vadd.xlane.f32.xlu0 %v1885
      %v1887 = vpop.xlane.xlu0 %1886
      %v1888 = vsel %vm237, %v1813, 0.0
      %1889 = vadd.xlane.f32.xlu0 %v1888
      %v1890 = vpop.xlane.xlu0 %1889
      %v1891 = vsel %vm237, %v1815, 0.0
      %1892 = vadd.xlane.f32.xlu0 %v1891
      %v1893 = vpop.xlane.xlu0 %1892
      %v1894 = vsel %vm237, %v1817, 0.0
      %1895 = vadd.xlane.f32.xlu0 %v1894
      %v1896 = vpop.xlane.xlu0 %1895
      %v1897 = vsel %vm237, %v1819, 0.0
      %1898 = vadd.xlane.f32.xlu0 %v1897
      %v1899 = vpop.xlane.xlu0 %1898
      %v1900 = vsel %vm237, %v1821, 0.0
      %1901 = vadd.xlane.f32.xlu0 %v1900
      %v1902 = vpop.xlane.xlu0 %1901
      %v1903 = vsel %vm237, %v1823, 0.0
      %1904 = vadd.xlane.f32.xlu0 %v1903
      %v1905 = vpop.xlane.xlu0 %1904
      %v1906 = vsel %vm237, %v1825, 0.0
      %1907 = vadd.xlane.f32.xlu0 %v1906
      %v1908 = vpop.xlane.xlu0 %1907
      %v1909 = vsel %vm237, %v1827, 0.0
      %1910 = vadd.xlane.f32.xlu0 %v1909
      %v1911 = vpop.xlane.xlu0 %1910
      %v1912 = vsel %vm237, %v1829, 0.0
      %1913 = vadd.xlane.f32.xlu0 %v1912
      %v1914 = vpop.xlane.xlu0 %1913
      %v1915 = vsel %vm237, %v1831, 0.0
      %1916 = vadd.xlane.f32.xlu0 %v1915
      %v1917 = vpop.xlane.xlu0 %1916
      %v1918 = vsel %vm237, %v1833, 0.0
      %1919 = vadd.xlane.f32.xlu0 %v1918
      %v1920 = vpop.xlane.xlu0 %1919
      %v1921 = vsel %vm237, %v1835, 0.0
      %1922 = vadd.xlane.f32.xlu0 %v1921
      %v1923 = vpop.xlane.xlu0 %1922
      %v1924 = vsel %vm237, %v1837, 0.0
      %1925 = vadd.xlane.f32.xlu0 %v1924
      %v1926 = vpop.xlane.xlu0 %1925
      %v1927 = vsel %vm237, %v1839, 0.0
      %1928 = vadd.xlane.f32.xlu0 %v1927
      %v1929 = vpop.xlane.xlu0 %1928
      %v1930 = vsel %vm237, %v1841, 0.0
      %1931 = vadd.xlane.f32.xlu0 %v1930
      %v1932 = vpop.xlane.xlu0 %1931
      %v1933 = vsel %vm237, %v1843, 0.0
      %1934 = vadd.xlane.f32.xlu0 %v1933
      %v1935 = vpop.xlane.xlu0 %1934
      %v1936 = vsel %vm237, %v1845, 0.0
      %1937 = vadd.xlane.f32.xlu0 %v1936
      %v1938 = vpop.xlane.xlu0 %1937
      %v1939 = vsel %vm237, %v1847, 0.0
      %1940 = vadd.xlane.f32.xlu0 %v1939
      %v1941 = vpop.xlane.xlu0 %1940
      %v1942 = vsel %vm237, %v1849, 0.0
      %1943 = vadd.xlane.f32.xlu0 %v1942
      %v1944 = vpop.xlane.xlu0 %1943
      %v1945 = vsel %vm237, %v1851, 0.0
      %1946 = vadd.xlane.f32.xlu0 %v1945
      %v1947 = vpop.xlane.xlu0 %1946
      %v1948 = vlog2.pop %v1854
      %v1949 = vmul.f32 %v1948, 0.6931472
      %v1950 = vlog2.pop %v1857
      %v1951 = vmul.f32 %v1950, 0.6931472
      %v1952 = vlog2.pop %v1860
      %v1953 = vmul.f32 %v1952, 0.6931472
      %v1954 = vlog2.pop %v1863
      %v1955 = vmul.f32 %v1954, 0.6931472
      %v1956 = vlog2.pop %v1866
      %v1957 = vmul.f32 %v1956, 0.6931472
      %v1958 = vlog2.pop %v1869
      %v1959 = vmul.f32 %v1958, 0.6931472
      %v1960 = vlog2.pop %v1872
      %v1961 = vmul.f32 %v1960, 0.6931472
      %v1962 = vlog2.pop %v1875
      %v1963 = vmul.f32 %v1962, 0.6931472
      %v1964 = vlog2.pop %v1878
      %v1965 = vmul.f32 %v1964, 0.6931472
      %v1966 = vlog2.pop %v1881
      %v1967 = vmul.f32 %v1966, 0.6931472
      %v1968 = vlog2.pop %v1884
      %v1969 = vmul.f32 %v1968, 0.6931472
      %v1970 = vlog2.pop %v1887
      %v1971 = vmul.f32 %v1970, 0.6931472
      %v1972 = vlog2.pop %v1890
      %v1973 = vmul.f32 %v1972, 0.6931472
      %v1974 = vlog2.pop %v1893
      %v1975 = vmul.f32 %v1974, 0.6931472
      %v1976 = vlog2.pop %v1896
      %v1977 = vmul.f32 %v1976, 0.6931472
      %v1978 = vlog2.pop %v1899
      %v1979 = vmul.f32 %v1978, 0.6931472
      %v1980 = vlog2.pop %v1902
      %v1981 = vmul.f32 %v1980, 0.6931472
      %v1982 = vlog2.pop %v1905
      %v1983 = vmul.f32 %v1982, 0.6931472
      %v1984 = vlog2.pop %v1908
      %v1985 = vmul.f32 %v1984, 0.6931472
      %v1986 = vlog2.pop %v1911
      %v1987 = vmul.f32 %v1986, 0.6931472
      %v1988 = vlog2.pop %v1914
      %v1989 = vmul.f32 %v1988, 0.6931472
      %v1990 = vlog2.pop %v1917
      %v1991 = vmul.f32 %v1990, 0.6931472
      %v1992 = vlog2.pop %v1920
      %v1993 = vmul.f32 %v1992, 0.6931472
      %v1994 = vlog2.pop %v1923
      %v1995 = vmul.f32 %v1994, 0.6931472
      %v1996 = vlog2.pop %v1926
      %v1997 = vmul.f32 %v1996, 0.6931472
      %v1998 = vlog2.pop %v1929
      %v1999 = vmul.f32 %v1998, 0.6931472
      %v2000 = vlog2.pop %v1932
      %v2001 = vmul.f32 %v2000, 0.6931472
      %v2002 = vlog2.pop %v1935
      %v2003 = vmul.f32 %v2002, 0.6931472
      %v2004 = vlog2.pop %v1938
      %v2005 = vmul.f32 %v2004, 0.6931472
      %v2006 = vlog2.pop %v1941
      %v2007 = vmul.f32 %v2006, 0.6931472
      %v2008 = vlog2.pop %v1944
      %v2009 = vmul.f32 %v2008, 0.6931472
      %v2010 = vlog2.pop %v1947
      %v2011 = vmul.f32 %v2010, 0.6931472
      %v2012 = vsub.f32 %v1756, %v1949
      %v2013 = vsub.f32 %v1757, %v1951
      %v2014 = vsub.f32 %v1758, %v1953
      %v2015 = vsub.f32 %v1759, %v1955
      %v2016 = vsub.f32 %v1760, %v1957
      %v2017 = vsub.f32 %v1761, %v1959
      %v2018 = vsub.f32 %v1762, %v1961
      %v2019 = vsub.f32 %v1763, %v1963
      %v2020 = vsub.f32 %v1764, %v1965
      %v2021 = vsub.f32 %v1765, %v1967
      %v2022 = vsub.f32 %v1766, %v1969
      %v2023 = vsub.f32 %v1767, %v1971
      %v2024 = vsub.f32 %v1768, %v1973
      %v2025 = vsub.f32 %v1769, %v1975
      %v2026 = vsub.f32 %v1770, %v1977
      %v2027 = vsub.f32 %v1771, %v1979
      %v2028 = vsub.f32 %v1772, %v1981
      %v2029 = vsub.f32 %v1773, %v1983
      %v2030 = vsub.f32 %v1774, %v1985
      %v2031 = vsub.f32 %v1775, %v1987
      %v2032 = vsub.f32 %v1776, %v1989
      %v2033 = vsub.f32 %v1777, %v1991
      %v2034 = vsub.f32 %v1778, %v1993
      %v2035 = vsub.f32 %v1779, %v1995
      %v2036 = vsub.f32 %v1780, %v1997
      %v2037 = vsub.f32 %v1781, %v1999
      %v2038 = vsub.f32 %v1782, %v2001
      %v2039 = vsub.f32 %v1783, %v2003
      %v2040 = vsub.f32 %v1784, %v2005
      %v2041 = vsub.f32 %v1785, %v2007
      %v2042 = vsub.f32 %v1786, %v2009
      %v2043 = vsub.f32 %v1787, %v2011
      %2044 = vst.msk [vmem:[%s199] sm:$0xff] %vm237, %v2012
      %2045 = vst.msk [vmem:[%s199 + $0x8] sm:$0xff] %vm237, %v2013
      %2046 = vst.msk [vmem:[%s199 + $0x10] sm:$0xff] %vm237, %v2014
      %2047 = vst.msk [vmem:[%s199 + $0x18] sm:$0xff] %vm237, %v2015
      %2048 = vst.msk [vmem:[%s199 + $0x20] sm:$0xff] %vm237, %v2016
      %2049 = vst.msk [vmem:[%s199 + $0x28] sm:$0xff] %vm237, %v2017
      %2050 = vst.msk [vmem:[%s199 + $0x30] sm:$0xff] %vm237, %v2018
      %2051 = vst.msk [vmem:[%s199 + $0x38] sm:$0xff] %vm237, %v2019
      %2052 = vst.msk [vmem:[%s199 + $0x40] sm:$0xff] %vm237, %v2020
      %2053 = vst.msk [vmem:[%s199 + $0x48] sm:$0xff] %vm237, %v2021
      %2054 = vst.msk [vmem:[%s199 + $0x50] sm:$0xff] %vm237, %v2022
      %2055 = vst.msk [vmem:[%s199 + $0x58] sm:$0xff] %vm237, %v2023
      %2056 = vst.msk [vmem:[%s199 + $0x60] sm:$0xff] %vm237, %v2024
      %2057 = vst.msk [vmem:[%s199 + $0x68] sm:$0xff] %vm237, %v2025
      %2058 = vst.msk [vmem:[%s199 + $0x70] sm:$0xff] %vm237, %v2026
      %2059 = vst.msk [vmem:[%s199 + $0x78] sm:$0xff] %vm237, %v2027
      %2060 = vst.msk [vmem:[%s199 + $0x80] sm:$0xff] %vm237, %v2028
      %2061 = vst.msk [vmem:[%s199 + $0x88] sm:$0xff] %vm237, %v2029
      %2062 = vst.msk [vmem:[%s199 + $0x90] sm:$0xff] %vm237, %v2030
      %2063 = vst.msk [vmem:[%s199 + $0x98] sm:$0xff] %vm237, %v2031
      %2064 = vst.msk [vmem:[%s199 + $0xa0] sm:$0xff] %vm237, %v2032
      %2065 = vst.msk [vmem:[%s199 + $0xa8] sm:$0xff] %vm237, %v2033
      %2066 = vst.msk [vmem:[%s199 + $0xb0] sm:$0xff] %vm237, %v2034
      %2067 = vst.msk [vmem:[%s199 + $0xb8] sm:$0xff] %vm237, %v2035
      %2068 = vst.msk [vmem:[%s199 + $0xc0] sm:$0xff] %vm237, %v2036
      %2069 = vst.msk [vmem:[%s199 + $0xc8] sm:$0xff] %vm237, %v2037
      %2070 = vst.msk [vmem:[%s199 + $0xd0] sm:$0xff] %vm237, %v2038
      %2071 = vst.msk [vmem:[%s199 + $0xd8] sm:$0xff] %vm237, %v2039
      %2072 = vst.msk [vmem:[%s199 + $0xe0] sm:$0xff] %vm237, %v2040
      %2073 = vst.msk [vmem:[%s199 + $0xe8] sm:$0xff] %vm237, %v2041
      %2074 = vst.msk [vmem:[%s199 + $0xf0] sm:$0xff] %vm237, %v2042
      %2075 = vst.msk [vmem:[%s199 + $0xf8] sm:$0xff] %vm237, %v2043
      %s2076 = smul.u32 32, %s15
      %p2077 = scmp.lt.s32.totalorder %s2076, 127
      %s2078 = scalar_select %p2077, %s2076, 127
      %s2079 = smul.addr %s2078, 8
      %s2080 = scalar_lea.vmem %s4, %s2079
      // Predicated region
      $region37: #{tpu_custom_call.1} parent=35 // pred_check
        %p2081 = pneg %p122
      $region38: #{tpu_custom_call.1} parent=35 // pred_check_branch
        %2083 = sbr.rel (%p2081) target = $region40
      $region39: #{tpu_custom_call.1} parent=35 // pred_region
        %s2084 = smul.u32 32, %s15
      $region40: #{tpu_custom_call.1} parent=35 // pred_fallthru
        _
    $region36: #{tpu_custom_call.1} parent=5 // pred_fallthru
      _
    %p2085 = scmp.le.s32.totalorder 2, %s10
    // Predicated region
    $region41: #{tpu_custom_call.1} parent=5 // pred_check
      %p2086 = pneg %p2085
    $region42: #{tpu_custom_call.1} parent=5 // pred_check_branch
      %2088 = sbr.rel (%p2086) target = $region44
    $region43: #{tpu_custom_call.1} parent=5 // pred_region
      %s2089 = ssub.s32 %s10, 2
      // Predicated region
      $region45: #{tpu_custom_call.1} parent=43 // pred_check
        %p2090 = pneg %p128
      $region46: #{tpu_custom_call.1} parent=43 // pred_check_branch
        %2092 = sbr.rel (%p2090) target = $region48
      $region47: #{tpu_custom_call.1} parent=43 // pred_region
        %s2093 = smul.u32 32, %s16
        %p2094 = scmp.lt.s32.totalorder %s2093, 127
        %s2095 = scalar_select %p2094, %s2093, 127
        %s2096 = smul.addr %s2095, 8
        %s2097 = scalar_lea.vmem %s4, %s2096
      $region48: #{tpu_custom_call.1} parent=43 // pred_fallthru
        _
    $region44: #{tpu_custom_call.1} parent=5 // pred_fallthru
      _
  $region6: #{tpu_custom_call.1} parent=0 // loop_footer
    %s14 = sadd.s32 1, %s10
  $region7: #{tpu_custom_call.1} parent=0 // loop_footer_branch
    %9 = sbr.rel target = $region3
  $region8: #{tpu_custom_call.1} parent=0 // loop_exit
    _

</llo_original>
